<compile_context>
chip_gen: v6e
topology: v6e:2x2x1
jax: 0.10.0
libtpu: 0.0.40
codegen_flags: <defaults>
</compile_context>

<pallas_src>
import math

import jax
import jax.numpy as jnp
import numpy as np
from jax import lax
from jax.experimental import pallas as pl
from jax.experimental.pallas import tpu as pltpu

EPS = 1e-5
NEG_SLOPE = 0.2
VMEM_LIMIT_BYTES = 48 * 1024 * 1024   # explicit scoped-VMEM limit, safe on v5e/v6e/v7x


def _round_up(a, b):
    return (a + b - 1) // b * b


def _samples_per_tile(n, l, target_lanes=512):
    """Whole samples per lane tile.  If there is more than one tile, the tile width
    must be a multiple of 128 lanes (BlockSpec (8,128) rule)."""
    if n * l <= max(target_lanes, l):
        return n                                     # single tile, no constraint
    base = (l * 128 // math.gcd(l, 128)) // l        # lcm(l, 128) / l
    spt = base * max(1, -(-target_lanes // (base * l)))
    return n if spt >= n else spt


def residual_block(x_ncl, params, *, mxu_dtype=jnp.bfloat16, target_tile_lanes=512):
    """Pallas TPU forward pass of ResidualBlock (training-mode BatchNorm)."""
    N, Cin, L = (int(d) for d in x_ncl.shape)
    Cout = int(params["w1"].shape[0])
    proj = Cin != Cout                      # projection shortcut vs nn.Identity

    Cp = _round_up(Cout, 16)                # padded channel counts (bf16 sublane pack)
    Cin_p = _round_up(Cin, 16)
    R = 2 * Cp                              # conv1 rows + (shortcut or zero) rows

    spt = _samples_per_tile(N, L, target_tile_lanes)
    N_pad = _round_up(N, spt)
    T = N_pad // spt
    TILE = spt * L
    NL_real = N * L
    NL_pad = N_pad * L
    inv_n = 1.0 / float(NL_real)

    # ---- lane-dense operands: channels on sublanes, N*L on lanes --------------------
    xf_host = jnp.transpose(x_ncl.astype(jnp.float32), (1, 0, 2)).reshape(Cin, NL_real)
    x = jnp.pad(xf_host, ((0, Cin_p - Cin), (0, NL_pad - NL_real))).astype(mxu_dtype)

    w1 = params["w1"].astype(jnp.float32)                         # (Cout, Cin, 3)
    w2 = params["w2"].astype(jnp.float32)                         # (Cout, Cout, 3)
    pad_in = lambda w: jnp.pad(w, ((0, Cp - Cout), (0, Cin_p - Cin)))
    pad_cc = lambda w: jnp.pad(w, ((0, Cp - Cout), (0, Cp - Cout)))
    zeros_ci = jnp.zeros((Cp, Cin_p), jnp.float32)
    ws_p = pad_in(params["ws"][:, :, 0].astype(jnp.float32)) if proj else zeros_ci
    # conv1 taps stacked on a leading axis; the 1x1 shortcut fused as extra output rows
    # of the middle tap.  Conv biases dropped: training-mode BN mean subtraction
    # cancels them exactly (identity shortcut has no conv, so nothing to cancel).
    w1k = jnp.stack([
        jnp.concatenate([pad_in(w1[:, :, 0]), zeros_ci], axis=0),
        jnp.concatenate([pad_in(w1[:, :, 1]), ws_p], axis=0),
        jnp.concatenate([pad_in(w1[:, :, 2]), zeros_ci], axis=0),
    ]).astype(mxu_dtype)                                          # (3, 2*Cp, Cin_p)
    w2k = jnp.stack([pad_cc(w2[:, :, k]) for k in range(3)]).astype(mxu_dtype)

    def col(v, n):
        v = v.astype(jnp.float32).reshape(-1)
        return jnp.pad(v, (0, n - v.shape[0])).reshape(n, 1)

    zcol = jnp.zeros((Cp, 1), jnp.float32)
    g12 = jnp.concatenate([col(params["g1"], Cp),
                           col(params["gs"], Cp) if proj else zcol], axis=0)
    b12 = jnp.concatenate([col(params["be1"], Cp),
                           col(params["bes"], Cp) if proj else zcol], axis=0)
    g2, b2 = col(params["g2"], Cp), col(params["be2"], Cp)

    # ---- in-kernel helpers (shared by both passes so BN2 stats match exactly) -------
    def boundary_masks(tile_start):
        lane = lax.broadcasted_iota(jnp.int32, (1, TILE), 1)
        pos = lane % L
        not_first = pos != 0                     # conv zero-pad at l == 0
        not_last = pos != (L - 1)                # conv zero-pad at l == L-1
        valid = (tile_start + lane) < NL_real    # mask padded batch samples (stats)
        return not_first, not_last, valid

    def shifted_taps(a_f32, not_first, not_last):
        # l-1 / l+1 conv taps: f32 lane rolls (XLU) + fused mask/downcast pass.
        prev = jnp.where(not_first, pltpu.roll(a_f32, 1, 1), 0.0).astype(mxu_dtype)
        nxt = jnp.where(not_last, pltpu.roll(a_f32, TILE - 1, 1), 0.0).astype(mxu_dtype)
        return prev, nxt

    def conv3(wk_ref, t_prev, t_mid, t_next):
        y = jnp.dot(wk_ref[0], t_prev, preferred_element_type=jnp.float32)
        y = y + jnp.dot(wk_ref[1], t_mid, preferred_element_type=jnp.float32)
        y = y + jnp.dot(wk_ref[2], t_next, preferred_element_type=jnp.float32)
        return y

    def scale_shift(s, q, gamma, beta):
        mu = s * inv_n
        var = jnp.maximum(q * inv_n - mu * mu, 0.0)
        # TODO(synk): single-pass E[x^2]-E[x]^2 can cancel for large means; switch to a
        #             shifted two-pass variance if that regime appears.
        sc = gamma * lax.rsqrt(var + EPS)
        return sc, beta - mu * sc

    def leaky(v):
        return jnp.maximum(v, NEG_SLOPE * v)

    def masked_sums(y, valid):
        s = jnp.sum(jnp.where(valid, y, 0.0), axis=1, keepdims=True)
        q = jnp.sum(jnp.where(valid, y * y, 0.0), axis=1, keepdims=True)
        return s, q

    # ---- pass 1: BN statistics (phase 0: conv1 + shortcut, phase 1: conv2) ----------
    def stats_kernel(x_ref, w1k_ref, w2k_ref, g12_ref, b12_ref,
                     s1_ref, q1_ref, s2_ref, q2_ref):
        ph = pl.program_id(0)
        t = pl.program_id(1)

        @pl.when(jnp.logical_and(ph == 0, t == 0))
        def _init():
            s1_ref[...] = jnp.zeros_like(s1_ref)
            q1_ref[...] = jnp.zeros_like(q1_ref)
            s2_ref[...] = jnp.zeros_like(s2_ref)
            q2_ref[...] = jnp.zeros_like(q2_ref)

        not_first, not_last, valid = boundary_masks(t * TILE)
        xf = x_ref[...].astype(jnp.float32)
        xp, xn = shifted_taps(xf, not_first, not_last)
        y1 = conv3(w1k_ref, xp, x_ref[...], xn)            # (2*Cp, TILE) f32

        @pl.when(ph == 0)
        def _accum_bn1():
            s, q = masked_sums(y1, valid)
            s1_ref[...] += s
            q1_ref[...] += q

        @pl.when(ph == 1)
        def _accum_bn2():
            s1 = s1_ref[...]
            q1 = q1_ref[...]
            g12v = g12_ref[...]
            b12v = b12_ref[...]
            sc1, sh1 = scale_shift(s1[:Cp], q1[:Cp], g12v[:Cp], b12v[:Cp])
            h = leaky(y1[:Cp, :] * sc1 + sh1)               # (Cp, TILE) f32
            hp, hn = shifted_taps(h, not_first, not_last)
            y2 = conv3(w2k_ref, hp, h.astype(mxu_dtype), hn)
            s, q = masked_sums(y2, valid)
            s2_ref[...] += s
            q2_ref[...] += q

    # ---- pass 2: apply (BN1 -> leaky -> conv2 -> BN2 -> + shortcut -> leaky) --------
    def apply_kernel(x_ref, w1k_ref, w2k_ref, g12_ref, b12_ref, g2_ref, b2_ref,
                     s1_ref, q1_ref, s2_ref, q2_ref, out_ref):
        t = pl.program_id(0)
        not_first, not_last, _ = boundary_masks(t * TILE)
        xf = x_ref[...].astype(jnp.float32)
        xp, xn = shifted_taps(xf, not_first, not_last)
        y1 = conv3(w1k_ref, xp, x_ref[...], xn)             # (2*Cp, TILE) f32

        sc1, sh1 = scale_shift(s1_ref[...], q1_ref[...], g12_ref[...], b12_ref[...])
        ybn = y1 * sc1 + sh1
        h = leaky(ybn[:Cp, :])                               # f32
        if proj:
            ident = ybn[Cp:, :]                              # BN(1x1-conv shortcut)
        else:
            ident = xf                                       # nn.Identity shortcut

        hp, hn = shifted_taps(h, not_first, not_last)
        y2 = conv3(w2k_ref, hp, h.astype(mxu_dtype), hn)
        sc2, sh2 = scale_shift(s2_ref[...], q2_ref[...], g2_ref[...], b2_ref[...])
        out_ref[...] = leaky(y2 * sc2 + sh2 + ident)

    # ---- pallas calls ----------------------------------------------------------------
    def const_spec(a):
        zeros = (0,) * a.ndim
        return pl.BlockSpec(a.shape, lambda *_: zeros)

    s1, q1, s2, q2 = pl.pallas_call(
        stats_kernel,
        out_shape=(jax.ShapeDtypeStruct((R, 1), jnp.float32),
                   jax.ShapeDtypeStruct((R, 1), jnp.float32),
                   jax.ShapeDtypeStruct((Cp, 1), jnp.float32),
                   jax.ShapeDtypeStruct((Cp, 1), jnp.float32)),
        grid=(2, T),
        in_specs=[pl.BlockSpec((Cin_p, TILE), lambda ph, t: (0, t)),
                  const_spec(w1k), const_spec(w2k), const_spec(g12), const_spec(b12)],
        out_specs=[pl.BlockSpec((R, 1), lambda ph, t: (0, 0)),
                   pl.BlockSpec((R, 1), lambda ph, t: (0, 0)),
                   pl.BlockSpec((Cp, 1), lambda ph, t: (0, 0)),
                   pl.BlockSpec((Cp, 1), lambda ph, t: (0, 0))],
        compiler_params=pltpu.CompilerParams(
            dimension_semantics=("arbitrary", "arbitrary"),
            vmem_limit_bytes=VMEM_LIMIT_BYTES),
    )(x, w1k, w2k, g12, b12)

    out2d = pl.pallas_call(
        apply_kernel,
        out_shape=jax.ShapeDtypeStruct((Cp, NL_pad), jnp.float32),
        grid=(T,),
        in_specs=[pl.BlockSpec((Cin_p, TILE), lambda t: (0, t)),
                  const_spec(w1k), const_spec(w2k), const_spec(g12), const_spec(b12),
                  const_spec(g2), const_spec(b2),
                  const_spec(s1), const_spec(q1), const_spec(s2), const_spec(q2)],
        out_specs=pl.BlockSpec((Cp, TILE), lambda t: (0, t)),
        compiler_params=pltpu.CompilerParams(
            dimension_semantics=("parallel",),
            vmem_limit_bytes=VMEM_LIMIT_BYTES),
    )(x, w1k, w2k, g12, b12, g2, b2, s1, q1, s2, q2)

    # (Cp, N_pad*L) -> (N, Cout, L)
    out = out2d[:Cout, :].reshape(Cout, N_pad, L)[:, :N, :]
    return jnp.transpose(out, (1, 0, 2))


# ---------------- pure-JAX reference (mirrors PyTorch semantics) ----------------
def reference(x_ncl, p):
    def conv1d(x, w, b, pad):
        y = lax.conv_general_dilated(x, w, (1,), [(pad, pad)],
                                     dimension_numbers=("NCH", "OIH", "NCH"))
        return y + b[None, :, None]

    def bn(x, g, be):
        mu = jnp.mean(x, axis=(0, 2), keepdims=True)
        var = jnp.mean((x - mu) ** 2, axis=(0, 2), keepdims=True)
        return (x - mu) / jnp.sqrt(var + EPS) * g[None, :, None] + be[None, :, None]

    leaky = lambda v: jnp.where(v > 0, v, NEG_SLOPE * v)
    if "ws" in p:
        ident = bn(conv1d(x_ncl, p["ws"], p["bs"], 0), p["gs"], p["bes"])
    else:
        ident = x_ncl
    out = leaky(bn(conv1d(x_ncl, p["w1"], p["b1"], 1), p["g1"], p["be1"]))
    out = bn(conv1d(out, p["w2"], p["b2"], 1), p["g2"], p["be2"])
    return leaky(out + ident)


def make_params(key, cin, cout):
    ks = jax.random.split(key, 12)
    p = {
        "w1": 0.2 * jax.random.normal(ks[0], (cout, cin, 3), jnp.float32),
        "b1": 0.1 * jax.random.normal(ks[1], (cout,), jnp.float32),
        "g1": 1.0 + 0.1 * jax.random.normal(ks[2], (cout,), jnp.float32),
        "be1": 0.1 * jax.random.normal(ks[3], (cout,), jnp.float32),
        "w2": 0.2 * jax.random.normal(ks[4], (cout, cout, 3), jnp.float32),
        "b2": 0.1 * jax.random.normal(ks[5], (cout,), jnp.float32),
        "g2": 1.0 + 0.1 * jax.random.normal(ks[6], (cout,), jnp.float32),
        "be2": 0.1 * jax.random.normal(ks[7], (cout,), jnp.float32),
    }
    if cin != cout:  # projection shortcut parameters
        p.update({
            "ws": 0.2 * jax.random.normal(ks[8], (cout, cin, 1), jnp.float32),
            "bs": 0.1 * jax.random.normal(ks[9], (cout,), jnp.float32),
            "gs": 1.0 + 0.1 * jax.random.normal(ks[10], (cout,), jnp.float32),
            "bes": 0.1 * jax.random.normal(ks[11], (cout,), jnp.float32),
        })
    return p


if __name__ == "__main__":
    key = jax.random.PRNGKey(0)
    k_proj, k_id, k_big, kx1, kx2, kx3 = jax.random.split(key, 6)

    # 1) projection shortcut (Cin != Cout), single lane tile.
    p1 = make_params(k_proj, 4, 8)
    x1 = jax.random.normal(kx1, (2, 4, 16), jnp.float32)
    ref1 = reference(x1, p1)
    out_f32 = jax.block_until_ready(residual_block(x1, p1, mxu_dtype=jnp.float32))
    np.testing.assert_allclose(np.asarray(out_f32), np.asarray(ref1), rtol=1e-3, atol=1e-3)
    out_bf16 = jax.block_until_ready(residual_block(x1, p1))          # bf16 MXU default
    np.testing.assert_allclose(np.asarray(out_bf16), np.asarray(ref1), rtol=5e-2, atol=5e-2)

    # 2) identity shortcut (Cin == Cout).
    p2 = make_params(k_id, 8, 8)
    x2 = jax.random.normal(kx2, (2, 8, 16), jnp.float32)
    out2 = jax.block_until_ready(residual_block(x2, p2, mxu_dtype=jnp.float32))
    np.testing.assert_allclose(np.asarray(out2), np.asarray(reference(x2, p2)),
                               rtol=1e-3, atol=1e-3)

    # 3) multi-tile path (T > 1, 512-lane tiles) with batch padding (N % samples-per-tile != 0).
    p3 = make_params(k_big, 8, 24)
    x3 = jax.random.normal(kx3, (10, 8, 128), jnp.float32)
    out3 = jax.block_until_ready(residual_block(x3, p3, mxu_dtype=jnp.float32))
    np.testing.assert_allclose(np.asarray(out3), np.asarray(reference(x3, p3)),
                               rtol=1e-3, atol=1e-3)

    print("KERNEL_OK")
</pallas_src>

<mosaic_0001>
module attributes {stable_mosaic.version = 11 : i64} {
  func.func @stats_kernel(%arg0: i32, %arg1: i32, %arg2: memref<16x32xf32, #tpu.memory_space<vmem>>, %arg3: memref<3x32x16xf32, #tpu.memory_space<vmem>>, %arg4: memref<3x16x16xf32, #tpu.memory_space<vmem>>, %arg5: memref<32x1xf32, #tpu.memory_space<vmem>>, %arg6: memref<32x1xf32, #tpu.memory_space<vmem>>, %arg7: memref<32x1xf32, #tpu.memory_space<vmem>>, %arg8: memref<32x1xf32, #tpu.memory_space<vmem>>, %arg9: memref<16x1xf32, #tpu.memory_space<vmem>>, %arg10: memref<16x1xf32, #tpu.memory_space<vmem>>) attributes {dimension_semantics = [#tpu.dimension_semantics<arbitrary>, #tpu.dimension_semantics<arbitrary>], iteration_bounds = array<i64: 2, 1>, scalar_prefetch = 0 : i64, scratch_operands = 0 : i64, tpu.core_type = #tpu.core_type<tc>, window_params = [{transform_indices = @transform_0, window_bounds = array<i64: 16, 32>}, {pipeline_mode = #tpu.pipeline_mode<synchronous>, transform_indices = @transform_1, window_bounds = array<i64: 3, 32, 16>}, {pipeline_mode = #tpu.pipeline_mode<synchronous>, transform_indices = @transform_2, window_bounds = array<i64: 3, 16, 16>}, {pipeline_mode = #tpu.pipeline_mode<synchronous>, transform_indices = @transform_3, window_bounds = array<i64: 32, 1>}, {pipeline_mode = #tpu.pipeline_mode<synchronous>, transform_indices = @transform_4, window_bounds = array<i64: 32, 1>}, {pipeline_mode = #tpu.pipeline_mode<synchronous>, transform_indices = @transform_5, window_bounds = array<i64: 32, 1>}, {pipeline_mode = #tpu.pipeline_mode<synchronous>, transform_indices = @transform_6, window_bounds = array<i64: 32, 1>}, {pipeline_mode = #tpu.pipeline_mode<synchronous>, transform_indices = @transform_7, window_bounds = array<i64: 16, 1>}, {pipeline_mode = #tpu.pipeline_mode<synchronous>, transform_indices = @transform_8, window_bounds = array<i64: 16, 1>}]} {
    %c0_i32 = arith.constant 0 : i32
    %0 = arith.cmpi eq, %arg0, %c0_i32 : i32
    %c0_i32_0 = arith.constant 0 : i32
    %1 = arith.cmpi eq, %arg1, %c0_i32_0 : i32
    %2 = arith.andi %0, %1 : i1
    %3 = arith.extui %2 : i1 to i32
    %c0_i32_1 = arith.constant 0 : i32
    %4 = arith.cmpi ne, %3, %c0_i32_1 : i32
    scf.if %4 {
      %cst_27 = arith.constant 0.000000e+00 : f32
      %60 = vector.broadcast %cst_27 : f32 to vector<32x1xf32>
      %c0_28 = arith.constant 0 : index
      %c0_29 = arith.constant 0 : index
      %61 = vector.load %arg7[%c0_28, %c0_29] : memref<32x1xf32, #tpu.memory_space<vmem>>, vector<32x1xf32>
      tpu.vector_store %arg7[%c0_28, %c0_29], %60 {strides = array<i32>} : memref<32x1xf32, #tpu.memory_space<vmem>>, vector<32x1xf32>,
      %cst_30 = arith.constant 0.000000e+00 : f32
      %62 = vector.broadcast %cst_30 : f32 to vector<32x1xf32>
      %c0_31 = arith.constant 0 : index
      %c0_32 = arith.constant 0 : index
      %63 = vector.load %arg8[%c0_31, %c0_32] : memref<32x1xf32, #tpu.memory_space<vmem>>, vector<32x1xf32>
      tpu.vector_store %arg8[%c0_31, %c0_32], %62 {strides = array<i32>} : memref<32x1xf32, #tpu.memory_space<vmem>>, vector<32x1xf32>,
      %cst_33 = arith.constant 0.000000e+00 : f32
      %64 = vector.broadcast %cst_33 : f32 to vector<16x1xf32>
      %c0_34 = arith.constant 0 : index
      %c0_35 = arith.constant 0 : index
      %65 = vector.load %arg9[%c0_34, %c0_35] : memref<16x1xf32, #tpu.memory_space<vmem>>, vector<16x1xf32>
      tpu.vector_store %arg9[%c0_34, %c0_35], %64 {strides = array<i32>} : memref<16x1xf32, #tpu.memory_space<vmem>>, vector<16x1xf32>,
      %cst_36 = arith.constant 0.000000e+00 : f32
      %66 = vector.broadcast %cst_36 : f32 to vector<16x1xf32>
      %c0_37 = arith.constant 0 : index
      %c0_38 = arith.constant 0 : index
      %67 = vector.load %arg10[%c0_37, %c0_38] : memref<16x1xf32, #tpu.memory_space<vmem>>, vector<16x1xf32>
      tpu.vector_store %arg10[%c0_37, %c0_38], %66 {strides = array<i32>} : memref<16x1xf32, #tpu.memory_space<vmem>>, vector<16x1xf32>,
    } else {
    }
    %c32_i32 = arith.constant 32 : i32
    %5 = arith.muli %arg1, %c32_i32 : i32
    %6 = tpu.iota {dimensions = array<i32: 1>} : vector<1x32xi32>
    %c16_i32 = arith.constant 16 : i32
    %c0_i32_2 = arith.constant 0 : i32
    %7 = arith.cmpi eq, %c16_i32, %c0_i32_2 : i32
    %c1_i32 = arith.constant 1 : i32
    %8 = arith.select %7, %c1_i32, %c16_i32 : i32
    %9 = vector.broadcast %8 : i32 to vector<1x32xi32>
    %10 = arith.remsi %6, %9 : vector<1x32xi32>
    %c0_i32_3 = arith.constant 0 : i32
    %11 = vector.broadcast %c0_i32_3 : i32 to vector<1x32xi32>
    %12 = arith.cmpi ne, %10, %11 : vector<1x32xi32>
    %c0_i32_4 = arith.constant 0 : i32
    %13 = vector.broadcast %c0_i32_4 : i32 to vector<1x32xi32>
    %14 = arith.cmpi slt, %10, %13 : vector<1x32xi32>
    %c0_i32_5 = arith.constant 0 : i32
    %15 = arith.cmpi slt, %8, %c0_i32_5 : i32
    %16 = vector.broadcast %15 : i1 to vector<1x32xi1>
    %17 = vector.broadcast %16 : vector<1x32xi1> to vector<1x32xi1>
    %18 = arith.xori %14, %17 : vector<1x32xi1>
    %19 = arith.andi %18, %12 : vector<1x32xi1>
    %20 = vector.broadcast %8 : i32 to vector<1x32xi32>
    %21 = arith.addi %10, %20 : vector<1x32xi32>
    %22 = arith.select %19, %21, %10 : vector<1x32xi1>, vector<1x32xi32>
    %c0_i32_6 = arith.constant 0 : i32
    %23 = vector.broadcast %c0_i32_6 : i32 to vector<1x32xi32>
    %24 = arith.cmpi ne, %22, %23 : vector<1x32xi32>
    %c15_i32 = arith.constant 15 : i32
    %25 = vector.broadcast %c15_i32 : i32 to vector<1x32xi32>
    %26 = arith.cmpi ne, %22, %25 : vector<1x32xi32>
    %27 = vector.broadcast %5 : i32 to vector<1x32xi32>
    %28 = arith.addi %27, %6 : vector<1x32xi32>
    %c32_i32_7 = arith.constant 32 : i32
    %29 = vector.broadcast %c32_i32_7 : i32 to vector<1x32xi32>
    %30 = arith.cmpi slt, %28, %29 : vector<1x32xi32>
    %c0 = arith.constant 0 : index
    %c0_8 = arith.constant 0 : index
    %31 = vector.load %arg2[%c0, %c0_8] : memref<16x32xf32, #tpu.memory_space<vmem>>, vector<16x32xf32>
    %c1_i32_9 = arith.constant 1 : i32
    %32 = tpu.dynamic_rotate %31 by %c1_i32_9 dim 1 : vector<16x32xf32>, i32 -> vector<16x32xf32>
    %cst = arith.constant 0.000000e+00 : f32
    %33 = vector.shape_cast %24 : vector<1x32xi1> to vector<1x32xi1>
    %34 = vector.broadcast %33 : vector<1x32xi1> to vector<16x32xi1>
    %35 = vector.broadcast %cst : f32 to vector<16x32xf32>
    %36 = arith.select %34, %32, %35 : vector<16x32xi1>, vector<16x32xf32>
    %c31_i32 = arith.constant 31 : i32
    %37 = tpu.dynamic_rotate %31 by %c31_i32 dim 1 : vector<16x32xf32>, i32 -> vector<16x32xf32>
    %cst_10 = arith.constant 0.000000e+00 : f32
    %38 = vector.shape_cast %26 : vector<1x32xi1> to vector<1x32xi1>
    %39 = vector.broadcast %38 : vector<1x32xi1> to vector<16x32xi1>
    %40 = vector.broadcast %cst_10 : f32 to vector<16x32xf32>
    %41 = arith.select %39, %37, %40 : vector<16x32xi1>, vector<16x32xf32>
    %c0_11 = arith.constant 0 : index
    %c0_12 = arith.constant 0 : index
    %42 = vector.load %arg2[%c0_11, %c0_12] : memref<16x32xf32, #tpu.memory_space<vmem>>, vector<16x32xf32>
    %c0_13 = arith.constant 0 : index
    %c0_14 = arith.constant 0 : index
    %c0_15 = arith.constant 0 : index
    %43 = vector.load %arg3[%c0_13, %c0_14, %c0_15] : memref<3x32x16xf32, #tpu.memory_space<vmem>>, vector<1x32x16xf32>
    %44 = vector.shape_cast %43 : vector<1x32x16xf32> to vector<32x16xf32>
    %cst_16 = arith.constant dense<0.000000e+00> : vector<32x32xf32>
    %45 = tpu.matmul %44, %36, %cst_16 {dimension_numbers = #tpu.dot_dimension_numbers<[1], [0], [0], [1], [0, 0, 1, 1], [], []>} : vector<32x16xf32>, vector<16x32xf32>, vector<32x32xf32> -> vector<32x32xf32>
    %c1 = arith.constant 1 : index
    %c0_17 = arith.constant 0 : index
    %c0_18 = arith.constant 0 : index
    %46 = vector.load %arg3[%c1, %c0_17, %c0_18] : memref<3x32x16xf32, #tpu.memory_space<vmem>>, vector<1x32x16xf32>
    %47 = vector.shape_cast %46 : vector<1x32x16xf32> to vector<32x16xf32>
    %cst_19 = arith.constant dense<0.000000e+00> : vector<32x32xf32>
    %48 = tpu.matmul %47, %42, %cst_19 {dimension_numbers = #tpu.dot_dimension_numbers<[1], [0], [0], [1], [0, 0, 1, 1], [], []>} : vector<32x16xf32>, vector<16x32xf32>, vector<32x32xf32> -> vector<32x32xf32>
    %49 = arith.addf %45, %48 : vector<32x32xf32>
    %c2 = arith.constant 2 : index
    %c0_20 = arith.constant 0 : index
    %c0_21 = arith.constant 0 : index
    %50 = vector.load %arg3[%c2, %c0_20, %c0_21] : memref<3x32x16xf32, #tpu.memory_space<vmem>>, vector<1x32x16xf32>
    %51 = vector.shape_cast %50 : vector<1x32x16xf32> to vector<32x16xf32>
    %cst_22 = arith.constant dense<0.000000e+00> : vector<32x32xf32>
    %52 = tpu.matmul %51, %41, %cst_22 {dimension_numbers = #tpu.dot_dimension_numbers<[1], [0], [0], [1], [0, 0, 1, 1], [], []>} : vector<32x16xf32>, vector<16x32xf32>, vector<32x32xf32> -> vector<32x32xf32>
    %53 = arith.addf %49, %52 : vector<32x32xf32>
    %c0_i32_23 = arith.constant 0 : i32
    %54 = arith.cmpi eq, %arg0, %c0_i32_23 : i32
    %55 = arith.extui %54 : i1 to i32
    %c0_i32_24 = arith.constant 0 : i32
    %56 = arith.cmpi ne, %55, %c0_i32_24 : i32
    scf.if %56 {
      %cst_27 = arith.constant 0.000000e+00 : f32
      %60 = vector.shape_cast %30 : vector<1x32xi1> to vector<1x32xi1>
      %61 = vector.broadcast %60 : vector<1x32xi1> to vector<32x32xi1>
      %62 = vector.broadcast %cst_27 : f32 to vector<32x32xf32>
      %63 = arith.select %61, %53, %62 : vector<32x32xi1>, vector<32x32xf32>
      %cst_28 = arith.constant dense<0.000000e+00> : vector<32xf32>
      %64 = vector.multi_reduction <add>, %63, %cst_28 [1] : vector<32x32xf32> to vector<32xf32>
      %65 = vector.shape_cast %64 : vector<32xf32> to vector<32x1xf32>
      %66 = arith.mulf %53, %53 : vector<32x32xf32>
      %cst_29 = arith.constant 0.000000e+00 : f32
      %67 = vector.shape_cast %30 : vector<1x32xi1> to vector<1x32xi1>
      %68 = vector.broadcast %67 : vector<1x32xi1> to vector<32x32xi1>
      %69 = vector.broadcast %cst_29 : f32 to vector<32x32xf32>
      %70 = arith.select %68, %66, %69 : vector<32x32xi1>, vector<32x32xf32>
      %cst_30 = arith.constant dense<0.000000e+00> : vector<32xf32>
      %71 = vector.multi_reduction <add>, %70, %cst_30 [1] : vector<32x32xf32> to vector<32xf32>
      %72 = vector.shape_cast %71 : vector<32xf32> to vector<32x1xf32>
      %c0_31 = arith.constant 0 : index
      %c0_32 = arith.constant 0 : index
      %73 = vector.load %arg7[%c0_31, %c0_32] : memref<32x1xf32, #tpu.memory_space<vmem>>, vector<32x1xf32>
      %74 = arith.addf %73, %65 : vector<32x1xf32>
      %c0_33 = arith.constant 0 : index
      %c0_34 = arith.constant 0 : index
      %75 = vector.load %arg7[%c0_33, %c0_34] : memref<32x1xf32, #tpu.memory_space<vmem>>, vector<32x1xf32>
      tpu.vector_store %arg7[%c0_33, %c0_34], %74 {strides = array<i32>} : memref<32x1xf32, #tpu.memory_space<vmem>>, vector<32x1xf32>,
      %c0_35 = arith.constant 0 : index
      %c0_36 = arith.constant 0 : index
      %76 = vector.load %arg8[%c0_35, %c0_36] : memref<32x1xf32, #tpu.memory_space<vmem>>, vector<32x1xf32>
      %77 = arith.addf %76, %72 : vector<32x1xf32>
      %c0_37 = arith.constant 0 : index
      %c0_38 = arith.constant 0 : index
      %78 = vector.load %arg8[%c0_37, %c0_38] : memref<32x1xf32, #tpu.memory_space<vmem>>, vector<32x1xf32>
      tpu.vector_store %arg8[%c0_37, %c0_38], %77 {strides = array<i32>} : memref<32x1xf32, #tpu.memory_space<vmem>>, vector<32x1xf32>,
    } else {
    }
    %c1_i32_25 = arith.constant 1 : i32
    %57 = arith.cmpi eq, %arg0, %c1_i32_25 : i32
    %58 = arith.extui %57 : i1 to i32
    %c0_i32_26 = arith.constant 0 : i32
    %59 = arith.cmpi ne, %58, %c0_i32_26 : i32
    scf.if %59 {
      %c0_27 = arith.constant 0 : index
      %c0_28 = arith.constant 0 : index
      %60 = vector.load %arg7[%c0_27, %c0_28] : memref<32x1xf32, #tpu.memory_space<vmem>>, vector<32x1xf32>
      %c0_29 = arith.constant 0 : index
      %c0_30 = arith.constant 0 : index
      %61 = vector.load %arg8[%c0_29, %c0_30] : memref<32x1xf32, #tpu.memory_space<vmem>>, vector<32x1xf32>
      %c0_31 = arith.constant 0 : index
      %c0_32 = arith.constant 0 : index
      %62 = vector.load %arg5[%c0_31, %c0_32] : memref<32x1xf32, #tpu.memory_space<vmem>>, vector<32x1xf32>
      %c0_33 = arith.constant 0 : index
      %c0_34 = arith.constant 0 : index
      %63 = vector.load %arg6[%c0_33, %c0_34] : memref<32x1xf32, #tpu.memory_space<vmem>>, vector<32x1xf32>
      %64 = vector.extract_strided_slice %60 {offsets = [0, 0], sizes = [16, 1], strides = [1, 1]} : vector<32x1xf32> to vector<16x1xf32>
      %65 = vector.extract_strided_slice %61 {offsets = [0, 0], sizes = [16, 1], strides = [1, 1]} : vector<32x1xf32> to vector<16x1xf32>
      %66 = vector.extract_strided_slice %62 {offsets = [0, 0], sizes = [16, 1], strides = [1, 1]} : vector<32x1xf32> to vector<16x1xf32>
      %67 = vector.extract_strided_slice %63 {offsets = [0, 0], sizes = [16, 1], strides = [1, 1]} : vector<32x1xf32> to vector<16x1xf32>
      %cst_35 = arith.constant 3.125000e-02 : f32
      %68 = vector.broadcast %cst_35 : f32 to vector<16x1xf32>
      %69 = arith.mulf %64, %68 : vector<16x1xf32>
      %cst_36 = arith.constant 3.125000e-02 : f32
      %70 = vector.broadcast %cst_36 : f32 to vector<16x1xf32>
      %71 = arith.mulf %65, %70 : vector<16x1xf32>
      %72 = arith.mulf %69, %69 : vector<16x1xf32>
      %73 = arith.subf %71, %72 : vector<16x1xf32>
      %cst_37 = arith.constant 0.000000e+00 : f32
      %74 = vector.broadcast %cst_37 : f32 to vector<16x1xf32>
      %75 = arith.maximumf %73, %74 : vector<16x1xf32>
      %cst_38 = arith.constant 9.99999974E-6 : f32
      %76 = vector.broadcast %cst_38 : f32 to vector<16x1xf32>
      %77 = arith.addf %75, %76 : vector<16x1xf32>
      %78 = math.rsqrt %77 : vector<16x1xf32>
      %79 = arith.mulf %66, %78 : vector<16x1xf32>
      %80 = arith.mulf %69, %79 : vector<16x1xf32>
      %81 = arith.subf %67, %80 : vector<16x1xf32>
      %82 = vector.extract_strided_slice %53 {offsets = [0, 0], sizes = [16, 32], strides = [1, 1]} : vector<32x32xf32> to vector<16x32xf32>
      %83 = vector.broadcast %79 : vector<16x1xf32> to vector<16x32xf32>
      %84 = arith.mulf %82, %83 : vector<16x32xf32>
      %85 = vector.broadcast %81 : vector<16x1xf32> to vector<16x32xf32>
      %86 = arith.addf %84, %85 : vector<16x32xf32>
      %cst_39 = arith.constant 2.000000e-01 : f32
      %87 = vector.broadcast %cst_39 : f32 to vector<16x32xf32>
      %88 = arith.mulf %87, %86 : vector<16x32xf32>
      %89 = arith.maximumf %86, %88 : vector<16x32xf32>
      %c1_i32_40 = arith.constant 1 : i32
      %90 = tpu.dynamic_rotate %89 by %c1_i32_40 dim 1 : vector<16x32xf32>, i32 -> vector<16x32xf32>
      %cst_41 = arith.constant 0.000000e+00 : f32
      %91 = vector.shape_cast %24 : vector<1x32xi1> to vector<1x32xi1>
      %92 = vector.broadcast %91 : vector<1x32xi1> to vector<16x32xi1>
      %93 = vector.broadcast %cst_41 : f32 to vector<16x32xf32>
      %94 = arith.select %92, %90, %93 : vector<16x32xi1>, vector<16x32xf32>
      %c31_i32_42 = arith.constant 31 : i32
      %95 = tpu.dynamic_rotate %89 by %c31_i32_42 dim 1 : vector<16x32xf32>, i32 -> vector<16x32xf32>
      %cst_43 = arith.constant 0.000000e+00 : f32
      %96 = vector.shape_cast %26 : vector<1x32xi1> to vector<1x32xi1>
      %97 = vector.broadcast %96 : vector<1x32xi1> to vector<16x32xi1>
      %98 = vector.broadcast %cst_43 : f32 to vector<16x32xf32>
      %99 = arith.select %97, %95, %98 : vector<16x32xi1>, vector<16x32xf32>
      %c0_44 = arith.constant 0 : index
      %c0_45 = arith.constant 0 : index
      %c0_46 = arith.constant 0 : index
      %100 = vector.load %arg4[%c0_44, %c0_45, %c0_46] : memref<3x16x16xf32, #tpu.memory_space<vmem>>, vector<1x16x16xf32>
      %101 = vector.shape_cast %100 : vector<1x16x16xf32> to vector<16x16xf32>
      %cst_47 = arith.constant dense<0.000000e+00> : vector<16x32xf32>
      %102 = tpu.matmul %101, %94, %cst_47 {dimension_numbers = #tpu.dot_dimension_numbers<[1], [0], [0], [1], [0, 0, 1, 1], [], []>} : vector<16x16xf32>, vector<16x32xf32>, vector<16x32xf32> -> vector<16x32xf32>
      %c1_48 = arith.constant 1 : index
      %c0_49 = arith.constant 0 : index
      %c0_50 = arith.constant 0 : index
      %103 = vector.load %arg4[%c1_48, %c0_49, %c0_50] : memref<3x16x16xf32, #tpu.memory_space<vmem>>, vector<1x16x16xf32>
      %104 = vector.shape_cast %103 : vector<1x16x16xf32> to vector<16x16xf32>
      %cst_51 = arith.constant dense<0.000000e+00> : vector<16x32xf32>
      %105 = tpu.matmul %104, %89, %cst_51 {dimension_numbers = #tpu.dot_dimension_numbers<[1], [0], [0], [1], [0, 0, 1, 1], [], []>} : vector<16x16xf32>, vector<16x32xf32>, vector<16x32xf32> -> vector<16x32xf32>
      %106 = arith.addf %102, %105 : vector<16x32xf32>
      %c2_52 = arith.constant 2 : index
      %c0_53 = arith.constant 0 : index
      %c0_54 = arith.constant 0 : index
      %107 = vector.load %arg4[%c2_52, %c0_53, %c0_54] : memref<3x16x16xf32, #tpu.memory_space<vmem>>, vector<1x16x16xf32>
      %108 = vector.shape_cast %107 : vector<1x16x16xf32> to vector<16x16xf32>
      %cst_55 = arith.constant dense<0.000000e+00> : vector<16x32xf32>
      %109 = tpu.matmul %108, %99, %cst_55 {dimension_numbers = #tpu.dot_dimension_numbers<[1], [0], [0], [1], [0, 0, 1, 1], [], []>} : vector<16x16xf32>, vector<16x32xf32>, vector<16x32xf32> -> vector<16x32xf32>
      %110 = arith.addf %106, %109 : vector<16x32xf32>
      %cst_56 = arith.constant 0.000000e+00 : f32
      %111 = vector.shape_cast %30 : vector<1x32xi1> to vector<1x32xi1>
      %112 = vector.broadcast %111 : vector<1x32xi1> to vector<16x32xi1>
      %113 = vector.broadcast %cst_56 : f32 to vector<16x32xf32>
      %114 = arith.select %112, %110, %113 : vector<16x32xi1>, vector<16x32xf32>
      %cst_57 = arith.constant dense<0.000000e+00> : vector<16xf32>
      %115 = vector.multi_reduction <add>, %114, %cst_57 [1] : vector<16x32xf32> to vector<16xf32>
      %116 = vector.shape_cast %115 : vector<16xf32> to vector<16x1xf32>
      %117 = arith.mulf %110, %110 : vector<16x32xf32>
      %cst_58 = arith.constant 0.000000e+00 : f32
      %118 = vector.shape_cast %30 : vector<1x32xi1> to vector<1x32xi1>
      %119 = vector.broadcast %118 : vector<1x32xi1> to vector<16x32xi1>
      %120 = vector.broadcast %cst_58 : f32 to vector<16x32xf32>
      %121 = arith.select %119, %117, %120 : vector<16x32xi1>, vector<16x32xf32>
      %cst_59 = arith.constant dense<0.000000e+00> : vector<16xf32>
      %122 = vector.multi_reduction <add>, %121, %cst_59 [1] : vector<16x32xf32> to vector<16xf32>
      %123 = vector.shape_cast %122 : vector<16xf32> to vector<16x1xf32>
      %c0_60 = arith.constant 0 : index
      %c0_61 = arith.constant 0 : index
      %124 = vector.load %arg9[%c0_60, %c0_61] : memref<16x1xf32, #tpu.memory_space<vmem>>, vector<16x1xf32>
      %125 = arith.addf %124, %116 : vector<16x1xf32>
      %c0_62 = arith.constant 0 : index
      %c0_63 = arith.constant 0 : index
      %126 = vector.load %arg9[%c0_62, %c0_63] : memref<16x1xf32, #tpu.memory_space<vmem>>, vector<16x1xf32>
      tpu.vector_store %arg9[%c0_62, %c0_63], %125 {strides = array<i32>} : memref<16x1xf32, #tpu.memory_space<vmem>>, vector<16x1xf32>,
      %c0_64 = arith.constant 0 : index
      %c0_65 = arith.constant 0 : index
      %127 = vector.load %arg10[%c0_64, %c0_65] : memref<16x1xf32, #tpu.memory_space<vmem>>, vector<16x1xf32>
      %128 = arith.addf %127, %123 : vector<16x1xf32>
      %c0_66 = arith.constant 0 : index
      %c0_67 = arith.constant 0 : index
      %129 = vector.load %arg10[%c0_66, %c0_67] : memref<16x1xf32, #tpu.memory_space<vmem>>, vector<16x1xf32>
      tpu.vector_store %arg10[%c0_66, %c0_67], %128 {strides = array<i32>} : memref<16x1xf32, #tpu.memory_space<vmem>>, vector<16x1xf32>,
    } else {
    }
    return
  }
  func.func @transform_0(%arg0: i32, %arg1: i32) -> (i32, i32) {
    %c0_i32 = arith.constant 0 : i32
    %c0_i32_0 = arith.constant 0 : i32
    return %c0_i32, %arg1 : i32, i32
  }
  func.func @transform_1(%arg0: i32, %arg1: i32) -> (i32, i32, i32) {
    %c0_i32 = arith.constant 0 : i32
    %c0_i32_0 = arith.constant 0 : i32
    %c0_i32_1 = arith.constant 0 : i32
    %c0_i32_2 = arith.constant 0 : i32
    return %c0_i32, %c0_i32_0, %c0_i32_1 : i32, i32, i32
  }
  func.func @transform_2(%arg0: i32, %arg1: i32) -> (i32, i32, i32) {
    %c0_i32 = arith.constant 0 : i32
    %c0_i32_0 = arith.constant 0 : i32
    %c0_i32_1 = arith.constant 0 : i32
    %c0_i32_2 = arith.constant 0 : i32
    return %c0_i32, %c0_i32_0, %c0_i32_1 : i32, i32, i32
  }
  func.func @transform_3(%arg0: i32, %arg1: i32) -> (i32, i32) {
    %c0_i32 = arith.constant 0 : i32
    %c0_i32_0 = arith.constant 0 : i32
    %c0_i32_1 = arith.constant 0 : i32
    return %c0_i32, %c0_i32_0 : i32, i32
  }
  func.func @transform_4(%arg0: i32, %arg1: i32) -> (i32, i32) {
    %c0_i32 = arith.constant 0 : i32
    %c0_i32_0 = arith.constant 0 : i32
    %c0_i32_1 = arith.constant 0 : i32
    return %c0_i32, %c0_i32_0 : i32, i32
  }
  func.func @transform_5(%arg0: i32, %arg1: i32) -> (i32, i32) {
    %c0_i32 = arith.constant 0 : i32
    %c0_i32_0 = arith.constant 0 : i32
    %c0_i32_1 = arith.constant 0 : i32
    return %c0_i32, %c0_i32_0 : i32, i32
  }
  func.func @transform_6(%arg0: i32, %arg1: i32) -> (i32, i32) {
    %c0_i32 = arith.constant 0 : i32
    %c0_i32_0 = arith.constant 0 : i32
    %c0_i32_1 = arith.constant 0 : i32
    return %c0_i32, %c0_i32_0 : i32, i32
  }
  func.func @transform_7(%arg0: i32, %arg1: i32) -> (i32, i32) {
    %c0_i32 = arith.constant 0 : i32
    %c0_i32_0 = arith.constant 0 : i32
    %c0_i32_1 = arith.constant 0 : i32
    return %c0_i32, %c0_i32_0 : i32, i32
  }
  func.func @transform_8(%arg0: i32, %arg1: i32) -> (i32, i32) {
    %c0_i32 = arith.constant 0 : i32
    %c0_i32_0 = arith.constant 0 : i32
    %c0_i32_1 = arith.constant 0 : i32
    return %c0_i32, %c0_i32_0 : i32, i32
  }
}

</mosaic_0001>

<llo_original>
// kernel: tpu_custom_call.1
$region0: #{tpu_custom_call.1}
  #allocation0 [shape = 'u32[]', space=smem, size = 0x4, offset = 0x4, fixed_abs, tag = 'smem constant byte address 0x4 - core index']
  #allocation1 [shape = 'u32[144,128]{1,0:T(1,128)}', space=vmem, size = 0x12000, scoped, tag = 'internal scratch']
  %s0 = inlined_call_operand.vmem [shape: f32[16,32], index: 0, kind: input, shape index: {}]
  %s1 = inlined_call_operand.vmem [shape: f32[3,32,16], index: 1, kind: input, shape index: {}]
  %s2 = inlined_call_operand.vmem [shape: f32[3,16,16], index: 2, kind: input, shape index: {}]
  %s3 = inlined_call_operand.vmem [shape: f32[32,1], index: 3, kind: input, shape index: {}]
  %s4 = inlined_call_operand.vmem [shape: f32[32,1], index: 4, kind: input, shape index: {}]
  %s5 = inlined_call_operand.vmem [shape: f32[32,1], index: 5, kind: output, shape index: {0}]
  %s6 = inlined_call_operand.vmem [shape: f32[32,1], index: 6, kind: output, shape index: {1}]
  %s7 = inlined_call_operand.vmem [shape: f32[16,1], index: 7, kind: output, shape index: {2}]
  %s8 = inlined_call_operand.vmem [shape: f32[16,1], index: 8, kind: output, shape index: {3}]
  %9 = xla_tuple %s5, %s6, %s7, %s8
  %s10 = sld [smem:[#allocation0]]
  $region89: #{tpu_custom_call.1} parent=0
    _
  %s12 = ssub.s32 1, %s10
  %s13 = scalar_select 0, %s12, %s10
  loop: start=0, step=1, limit=4
  $region2: #{tpu_custom_call.1} parent=0 // loop_pre_header
    _
  $region3: #{tpu_custom_call.1} parent=0 // loop_header
    %s15 = sphi 0, %s19
    %p16 = scmp.ge.s32.totalorder %s15, 4
    %s22 = sphi 0, %s34
    %s23 = sphi 0, %s30
    %s24 = sphi 0, %s22
    %s25 = sphi 0, %s23
    %s26 = sphi 0, %s24
    %s27 = sphi 0, %s25
    %s37 = sphi 0, %s39
    %s40 = sphi 0, %s37
    %s41 = sphi 0, %s40
    %s57 = sphi 0, %s41
    %s61 = sphi 0, %s61
    %s63 = sphi 0, %s61
    %s64 = sphi 0, %s63
    %s78 = sphi 0, %s64
    %s82 = sphi 0, %s82
    %s84 = sphi 0, %s82
    %s85 = sphi 0, %s84
    %s99 = sphi 0, %s85
    %s103 = sphi 0, %s103
    %s105 = sphi 0, %s103
    %s106 = sphi 0, %s105
    %s120 = sphi 0, %s106
    %s124 = sphi 0, %s124
    %s126 = sphi 0, %s124
    %s127 = sphi 0, %s126
    %s141 = sphi 0, %s127
    %s145 = sphi 0, %s145
    %s147 = sphi 0, %s145
    %s148 = sphi 0, %s147
    %s162 = sphi 0, %s148
    %s166 = sphi 0, %s166
    %s168 = sphi 0, %s166
    %s169 = sphi 0, %s168
    %s183 = sphi 0, %s169
    %s187 = sphi 0, %s187
    %s189 = sphi 0, %s187
    %s190 = sphi 0, %s189
    %s204 = sphi 0, %s190
    %s208 = sphi 0, %s208
    %s210 = sphi 0, %s208
    %s211 = sphi 0, %s210
    %s225 = sphi 0, %s211
  $region4: #{tpu_custom_call.1} parent=0 // loop_header_branch
    %18 = sbr.rel (%p16) target = $region8
  $region5: #{tpu_custom_call.1} parent=0 // loop_body
    %s20 = ssub.s32 %s15, 1
    %s21 = ssub.s32 %s15, 2
    %s28 = sadd.s32 1, %s23
    %p29 = scmp.ge.s32.totalorder %s28, 1
    %s30 = scalar_select %p29, 0, %s28
    %s31 = sadd.s32 1, %s22
    %s32 = scalar_select %p29, %s31, %s22
    %p33 = scmp.ge.s32.totalorder %s32, 2
    %s34 = scalar_select %p33, 0, %s32
    %s35 = ssub.s32 %s23, %s30
    %p36 = scmp.eq.s32.totalorder %s35, 0
    %s38 = sadd.s32 %s37, 1
    %s39 = scalar_select %p36, %s37, %s38
    %p42 = pneg %p36
    %p43 = scmp.eq.s32.totalorder %s15, 1
    %p44 = por %p42, %p43
    %p45 = scmp.ne.s32.totalorder %s37, %s40
    %p46 = scmp.eq.s32.totalorder %s15, 0
    %p47 = por %p45, %p46
    %p48 = scmp.ne.s32.totalorder %s37, %s40
    %p49 = scmp.eq.s32.totalorder %s20, 1
    %p50 = por %p48, %p49
    %p51 = scmp.ne.s32.totalorder %s40, %s41
    %p52 = scmp.eq.s32.totalorder %s20, 0
    %p53 = por %p51, %p52
    %p54 = scmp.ne.s32.totalorder %s40, %s41
    %p55 = scmp.eq.s32.totalorder %s21, 1
    %p56 = por %p54, %p55
    %p58 = scmp.ne.s32.totalorder %s41, %s57
    %p59 = scmp.eq.s32.totalorder %s21, 0
    %p60 = por %p58, %p59
    %s62 = sadd.s32 %s61, 1
    %p65 = scmp.eq.s32.totalorder %s15, 1
    %p66 = scmp.ne.s32.totalorder %s61, %s63
    %p67 = scmp.eq.s32.totalorder %s15, 0
    %p68 = por %p66, %p67
    %p69 = scmp.ne.s32.totalorder %s61, %s63
    %p70 = scmp.eq.s32.totalorder %s20, 1
    %p71 = por %p69, %p70
    %p72 = scmp.ne.s32.totalorder %s63, %s64
    %p73 = scmp.eq.s32.totalorder %s20, 0
    %p74 = por %p72, %p73
    %p75 = scmp.ne.s32.totalorder %s63, %s64
    %p76 = scmp.eq.s32.totalorder %s21, 1
    %p77 = por %p75, %p76
    %p79 = scmp.ne.s32.totalorder %s64, %s78
    %p80 = scmp.eq.s32.totalorder %s21, 0
    %p81 = por %p79, %p80
    %s83 = sadd.s32 %s82, 1
    %p86 = scmp.eq.s32.totalorder %s15, 1
    %p87 = scmp.ne.s32.totalorder %s82, %s84
    %p88 = scmp.eq.s32.totalorder %s15, 0
    %p89 = por %p87, %p88
    %p90 = scmp.ne.s32.totalorder %s82, %s84
    %p91 = scmp.eq.s32.totalorder %s20, 1
    %p92 = por %p90, %p91
    %p93 = scmp.ne.s32.totalorder %s84, %s85
    %p94 = scmp.eq.s32.totalorder %s20, 0
    %p95 = por %p93, %p94
    %p96 = scmp.ne.s32.totalorder %s84, %s85
    %p97 = scmp.eq.s32.totalorder %s21, 1
    %p98 = por %p96, %p97
    %p100 = scmp.ne.s32.totalorder %s85, %s99
    %p101 = scmp.eq.s32.totalorder %s21, 0
    %p102 = por %p100, %p101
    %s104 = sadd.s32 %s103, 1
    %p107 = scmp.eq.s32.totalorder %s15, 1
    %p108 = scmp.ne.s32.totalorder %s103, %s105
    %p109 = scmp.eq.s32.totalorder %s15, 0
    %p110 = por %p108, %p109
    %p111 = scmp.ne.s32.totalorder %s103, %s105
    %p112 = scmp.eq.s32.totalorder %s20, 1
    %p113 = por %p111, %p112
    %p114 = scmp.ne.s32.totalorder %s105, %s106
    %p115 = scmp.eq.s32.totalorder %s20, 0
    %p116 = por %p114, %p115
    %p117 = scmp.ne.s32.totalorder %s105, %s106
    %p118 = scmp.eq.s32.totalorder %s21, 1
    %p119 = por %p117, %p118
    %p121 = scmp.ne.s32.totalorder %s106, %s120
    %p122 = scmp.eq.s32.totalorder %s21, 0
    %p123 = por %p121, %p122
    %s125 = sadd.s32 %s124, 1
    %p128 = scmp.eq.s32.totalorder %s15, 1
    %p129 = scmp.ne.s32.totalorder %s124, %s126
    %p130 = scmp.eq.s32.totalorder %s15, 0
    %p131 = por %p129, %p130
    %p132 = scmp.ne.s32.totalorder %s124, %s126
    %p133 = scmp.eq.s32.totalorder %s20, 1
    %p134 = por %p132, %p133
    %p135 = scmp.ne.s32.totalorder %s126, %s127
    %p136 = scmp.eq.s32.totalorder %s20, 0
    %p137 = por %p135, %p136
    %p138 = scmp.ne.s32.totalorder %s126, %s127
    %p139 = scmp.eq.s32.totalorder %s21, 1
    %p140 = por %p138, %p139
    %p142 = scmp.ne.s32.totalorder %s127, %s141
    %p143 = scmp.eq.s32.totalorder %s21, 0
    %p144 = por %p142, %p143
    %s146 = sadd.s32 %s145, 1
    %p149 = scmp.eq.s32.totalorder %s15, 1
    %p150 = scmp.ne.s32.totalorder %s145, %s147
    %p151 = scmp.eq.s32.totalorder %s15, 0
    %p152 = por %p150, %p151
    %p153 = scmp.ne.s32.totalorder %s145, %s147
    %p154 = scmp.eq.s32.totalorder %s20, 1
    %p155 = por %p153, %p154
    %p156 = scmp.ne.s32.totalorder %s147, %s148
    %p157 = scmp.eq.s32.totalorder %s20, 0
    %p158 = por %p156, %p157
    %p159 = scmp.ne.s32.totalorder %s147, %s148
    %p160 = scmp.eq.s32.totalorder %s21, 1
    %p161 = por %p159, %p160
    %p163 = scmp.ne.s32.totalorder %s148, %s162
    %p164 = scmp.eq.s32.totalorder %s21, 0
    %p165 = por %p163, %p164
    %s167 = sadd.s32 %s166, 1
    %p170 = scmp.eq.s32.totalorder %s15, 1
    %p171 = scmp.ne.s32.totalorder %s166, %s168
    %p172 = scmp.eq.s32.totalorder %s15, 0
    %p173 = por %p171, %p172
    %p174 = scmp.ne.s32.totalorder %s166, %s168
    %p175 = scmp.eq.s32.totalorder %s20, 1
    %p176 = por %p174, %p175
    %p177 = scmp.ne.s32.totalorder %s168, %s169
    %p178 = scmp.eq.s32.totalorder %s20, 0
    %p179 = por %p177, %p178
    %p180 = scmp.ne.s32.totalorder %s168, %s169
    %p181 = scmp.eq.s32.totalorder %s21, 1
    %p182 = por %p180, %p181
    %p184 = scmp.ne.s32.totalorder %s169, %s183
    %p185 = scmp.eq.s32.totalorder %s21, 0
    %p186 = por %p184, %p185
    %s188 = sadd.s32 %s187, 1
    %p191 = scmp.eq.s32.totalorder %s15, 1
    %p192 = scmp.ne.s32.totalorder %s187, %s189
    %p193 = scmp.eq.s32.totalorder %s15, 0
    %p194 = por %p192, %p193
    %p195 = scmp.ne.s32.totalorder %s187, %s189
    %p196 = scmp.eq.s32.totalorder %s20, 1
    %p197 = por %p195, %p196
    %p198 = scmp.ne.s32.totalorder %s189, %s190
    %p199 = scmp.eq.s32.totalorder %s20, 0
    %p200 = por %p198, %p199
    %p201 = scmp.ne.s32.totalorder %s189, %s190
    %p202 = scmp.eq.s32.totalorder %s21, 1
    %p203 = por %p201, %p202
    %p205 = scmp.ne.s32.totalorder %s190, %s204
    %p206 = scmp.eq.s32.totalorder %s21, 0
    %p207 = por %p205, %p206
    %s209 = sadd.s32 %s208, 1
    %p212 = scmp.eq.s32.totalorder %s15, 1
    %p213 = scmp.ne.s32.totalorder %s208, %s210
    %p214 = scmp.eq.s32.totalorder %s15, 0
    %p215 = por %p213, %p214
    %p216 = scmp.ne.s32.totalorder %s208, %s210
    %p217 = scmp.eq.s32.totalorder %s20, 1
    %p218 = por %p216, %p217
    %p219 = scmp.ne.s32.totalorder %s210, %s211
    %p220 = scmp.eq.s32.totalorder %s20, 0
    %p221 = por %p219, %p220
    %p222 = scmp.ne.s32.totalorder %s210, %s211
    %p223 = scmp.eq.s32.totalorder %s21, 1
    %p224 = por %p222, %p223
    %p226 = scmp.ne.s32.totalorder %s211, %s225
    %p227 = scmp.eq.s32.totalorder %s21, 0
    %p228 = por %p226, %p227
    %p229 = scmp.le.s32.totalorder 1, %s15
    %p230 = scmp.lt.s32.totalorder %s15, 3
    %p231 = pnand %p229, %p230
    %p232 = pneg %p231
    // Predicated region
    $region9: #{tpu_custom_call.1} parent=5 // pred_check
      _
    $region10: #{tpu_custom_call.1} parent=5 // pred_check_branch
      %234 = sbr.rel (%p231) target = $region12
    $region11: #{tpu_custom_call.1} parent=5 // pred_region
      %s235 = ssub.s32 %s15, 1
      // Predicated region
      $region13: #{tpu_custom_call.1} parent=11 // pred_check
        %p236 = pneg %p53
      $region14: #{tpu_custom_call.1} parent=11 // pred_check_branch
        %238 = sbr.rel (%p236) target = $region16
      $region15: #{tpu_custom_call.1} parent=11 // pred_region
        %p239 = scmp.lt.s32.totalorder %s25, 0
        %s240 = scalar_select %p239, %s25, 0
        %s241 = smul.addr %s240, 8
        %s242 = scalar_lea.vmem %s0, %s241
      $region16: #{tpu_custom_call.1} parent=11 // pred_fallthru
        _
      // Predicated region
      $region17: #{tpu_custom_call.1} parent=11 // pred_check
        %p243 = pneg %p74
      $region18: #{tpu_custom_call.1} parent=11 // pred_check_branch
        %245 = sbr.rel (%p243) target = $region20
      $region19: #{tpu_custom_call.1} parent=11 // pred_region
        _
      $region20: #{tpu_custom_call.1} parent=11 // pred_fallthru
        _
      // Predicated region
      $region21: #{tpu_custom_call.1} parent=11 // pred_check
        %p246 = pneg %p95
      $region22: #{tpu_custom_call.1} parent=11 // pred_check_branch
        %248 = sbr.rel (%p246) target = $region24
      $region23: #{tpu_custom_call.1} parent=11 // pred_region
        _
      $region24: #{tpu_custom_call.1} parent=11 // pred_fallthru
        _
      // Predicated region
      $region25: #{tpu_custom_call.1} parent=11 // pred_check
        %p249 = pneg %p116
      $region26: #{tpu_custom_call.1} parent=11 // pred_check_branch
        %251 = sbr.rel (%p249) target = $region28
      $region27: #{tpu_custom_call.1} parent=11 // pred_region
        _
      $region28: #{tpu_custom_call.1} parent=11 // pred_fallthru
        _
      // Predicated region
      $region29: #{tpu_custom_call.1} parent=11 // pred_check
        %p252 = pneg %p137
      $region30: #{tpu_custom_call.1} parent=11 // pred_check_branch
        %254 = sbr.rel (%p252) target = $region32
      $region31: #{tpu_custom_call.1} parent=11 // pred_region
        _
      $region32: #{tpu_custom_call.1} parent=11 // pred_fallthru
        _
    $region12: #{tpu_custom_call.1} parent=5 // pred_fallthru
      _
    %p255 = scmp.lt.s32.totalorder %s15, 2
    // Predicated region
    $region33: #{tpu_custom_call.1} parent=5 // pred_check
      %p256 = pneg %p255
    $region34: #{tpu_custom_call.1} parent=5 // pred_check_branch
      %258 = sbr.rel (%p256) target = $region36
    $region35: #{tpu_custom_call.1} parent=5 // pred_region
      _
    $region36: #{tpu_custom_call.1} parent=5 // pred_fallthru
      _
    %p259 = scmp.le.s32.totalorder 1, %s15
    %p260 = scmp.lt.s32.totalorder %s15, 3
    %p261 = pnand %p259, %p260
    %p262 = pneg %p261
    // Predicated region
    $region37: #{tpu_custom_call.1} parent=5 // pred_check
      _
    $region38: #{tpu_custom_call.1} parent=5 // pred_check_branch
      %264 = sbr.rel (%p261) target = $region40
    $region39: #{tpu_custom_call.1} parent=5 // pred_region
      %s265 = ssub.s32 %s15, 1
      %p266 = scmp.lt.s32.totalorder %s25, 0
      %s267 = scalar_select %p266, %s25, 0
      %s268 = smul.addr %s267, 8
      %s269 = scalar_lea.vmem %s0, %s268
      %p270 = pneg %p53
      %p271 = pneg %p50
      %p272 = pneg %p74
      %p273 = pneg %p71
      %p274 = pneg %p95
      %p275 = pneg %p92
      %p276 = pneg %p116
      %p277 = pneg %p113
      %p278 = pneg %p137
      %p279 = pneg %p134
      %p280 = pneg %p158
      %p281 = pneg %p155
      %p282 = pneg %p179
      %p283 = pneg %p176
      %p284 = pneg %p200
      %p285 = pneg %p197
      %p286 = pneg %p221
      %p287 = pneg %p218
      %p288 = scmp.lt.s32.totalorder %s25, 0
      %s289 = scalar_select %p288, %s25, 0
      %s290 = smul.addr %s289, 8
      %s291 = scalar_lea.vmem %s0, %s290
      %p292 = scmp.eq.s32.totalorder %s24, 0
      %p293 = scmp.eq.s32.totalorder %s25, 0
      %p294 = pnand %p292, %p293
      %p295 = pneg %p294
      // Predicated region
      $region41: #{tpu_custom_call.1} parent=39 // pred_check
        _
      $region42: #{tpu_custom_call.1} parent=39 // pred_check_branch
        %297 = sbr.rel (%p294) target = $region44
      $region43: #{tpu_custom_call.1} parent=39 // pred_region
        %vm298 = vcmask 7168
        %299 = vst.msk [vmem:[%s5] sm:$0xff] %vm298, 0.0
        %300 = vst.msk [vmem:[%s5 + $0x8] sm:$0xff] %vm298, 0.0
        %301 = vst.msk [vmem:[%s5 + $0x10] sm:$0xff] %vm298, 0.0
        %302 = vst.msk [vmem:[%s5 + $0x18] sm:$0xff] %vm298, 0.0
        %303 = vst.msk [vmem:[%s6] sm:$0xff] %vm298, 0.0
        %304 = vst.msk [vmem:[%s6 + $0x8] sm:$0xff] %vm298, 0.0
        %305 = vst.msk [vmem:[%s6 + $0x10] sm:$0xff] %vm298, 0.0
        %306 = vst.msk [vmem:[%s6 + $0x18] sm:$0xff] %vm298, 0.0
        %307 = vst.msk [vmem:[%s7] sm:$0xff] %vm298, 0.0
        %308 = vst.msk [vmem:[%s7 + $0x8] sm:$0xff] %vm298, 0.0
        %309 = vst.msk [vmem:[%s8] sm:$0xff] %vm298, 0.0
        %310 = vst.msk [vmem:[%s8 + $0x8] sm:$0xff] %vm298, 0.0
      $region44: #{tpu_custom_call.1} parent=39 // pred_fallthru
        _
      %s311 = smul.u32 %s25, 32
      %v312 = vlaneseq
      %v313 = vand.u32 %v312, 127
      %vm314 = vcmp.lt.s32.totalorder %v313, 0
      %v315 = vsub.s32 0, %v313
      %v316 = vsel %vm314, %v315, %v313
      %v317 = vshrl.u32 %v316, 4
      %v318 = vand.u32 %v316, 15
      %v319 = vsub.s32 0, %v318
      %v320 = vsel %vm314, %v319, %v318
      %vm321 = vcmp.ne.s32.totalorder %v320, 0
      %vm322 = vcmp.lt.s32.totalorder %v320, 0
      %vm323 = vmand %vm322, %vm321
      %v324 = vadd.s32 %v320, 16
      %v325 = vsel %vm323, %v324, %v320
      %vm326 = vcmp.ne.s32.totalorder %v325, 0
      %vm327 = vcmp.ne.s32.totalorder %v325, 15
      %v328 = vstv %s311
      %v329 = vadd.s32 %v328, %v313
      %vm330 = vcmp.lt.s32.totalorder %v329, 32
      %v331 = vld [vmem:[%s291] sm:$0xff]
      %v332 = vld [vmem:[%s291 + $0x8] sm:$0xff]
      %vm333 = vcmask 1047808
      %334 = vrot.lane.b32.xlu0 %v331, 32
      %v335 = vpop.permute.xlu0 %334
      %v336 = vsel %vm333, %v335, %v331
      %337 = vrot.lane.b32.xlu0 %v332, 32
      %v338 = vpop.permute.xlu0 %337
      %v339 = vsel %vm333, %v338, %v332
      %340 = vrot.lane.b32.xlu0 %v336, 32
      %v341 = vpop.permute.xlu0 %340
      %342 = vrot.lane.b32.xlu0 %v339, 32
      %v343 = vpop.permute.xlu0 %342
      %v344 = vsel %vm333, %v341, %v331
      %v345 = vsel %vm333, %v343, %v332
      %v346 = vsel %vm326, 1, 0
      %vm347 = vcmp.eq.s32.totalorder %v346, 1
      %350 = vrot.lane.b32.xlu0 %v344, 97
      %v351 = vpop.permute.xlu0 %350
      %352 = vrot.lane.b32.xlu0 %v345, 97
      %v353 = vpop.permute.xlu0 %352
      %v356 = vsel %vm347, %v351, 0.0
      %v357 = vsel %vm347, %v353, 0.0
      %v358 = vsel %vm327, 1, 0
      %vm359 = vcmp.eq.s32.totalorder %v358, 1
      %360 = vrot.lane.b32.xlu0 %v344, 127
      %v361 = vpop.permute.xlu0 %360
      %362 = vrot.lane.b32.xlu0 %v345, 127
      %v363 = vpop.permute.xlu0 %362
      %v366 = vsel %vm359, %v361, 0.0
      %v367 = vsel %vm359, %v363, 0.0
      %v368 = vld [vmem:[%s1] sm:$0xff]
      %v369 = vld [vmem:[%s1 + $0x8] sm:$0xff]
      %v370 = vld [vmem:[%s1 + $0x10] sm:$0xff]
      %v371 = vld [vmem:[%s1 + $0x18] sm:$0xff]
      %s372 = scalar_lea.vmem %s1, 32
      %v373 = vld [vmem:[%s372] sm:$0xff]
      %v374 = vld [vmem:[%s372 + $0x8] sm:$0xff]
      %v375 = vld [vmem:[%s372 + $0x10] sm:$0xff]
      %v376 = vld [vmem:[%s372 + $0x18] sm:$0xff]
      %vm377 = vcmask 130048
      %v379 = vsel %vm377, %v373, 0
      %v382 = vsel %vm377, %v374, 0
      %v385 = vsel %vm377, %v375, 0
      %v388 = vsel %vm377, %v376, 0
      %390 = vmatprep.subr.mxu0 0.0
      %391 = vmatpush1.msra.mxu0 0.0
      %392 = vmatprep.subr.mxu0 0.0
      %393 = vmatpush1.msra.mxu0 0.0
      %394 = vmatprep.subr.mxu0 0.0
      %395 = vmatpush1.msra.mxu0 0.0
      %396 = vmatprep.subr.mxu0 0.0
      %397 = vmatpush1.msra.mxu0 0.0
      %398 = vmatprep.subr.mxu0 0.0
      %399 = vmatpush1.msra.mxu0 0.0
      %400 = vmatprep.subr.mxu0 0.0
      %401 = vmatpush1.msra.mxu0 0.0
      %402 = vmatprep.subr.mxu0 0.0
      %403 = vmatpush1.msra.mxu0 0.0
      %404 = vmatprep.subr.mxu0 0.0
      %405 = vmatpush1.msra.mxu0 0.0
      %406 = vmatprep.subr.mxu0 0.0
      %407 = vmatpush1.msra.mxu0 0.0
      %408 = vmatprep.subr.mxu0 0.0
      %409 = vmatpush1.msra.mxu0 0.0
      %410 = vmatprep.subr.mxu0 0.0
      %411 = vmatpush1.msra.mxu0 0.0
      %412 = vmatprep.subr.mxu0 0.0
      %413 = vmatpush1.msra.mxu0 0.0
      %414 = vmatprep.subr.mxu0 0.0
      %415 = vmatpush1.msra.mxu0 0.0
      %416 = vmatprep.subr.mxu0 0.0
      %417 = vmatpush1.msra.mxu0 0.0
      %418 = vmatprep.subr.mxu0 0.0
      %419 = vmatpush1.msra.mxu0 %v332
      %420 = vmatprep.subr.mxu0 0.0
      %421 = vmatpush1.msra.mxu0 %v331
      %422 = vmatprep.subr.mxu0 0.0
      %423 = vmatpush2.msra.mxu0 0.0
      %424 = vmatprep.subr.mxu0 0.0
      %425 = vmatpush2.msra.mxu0 0.0
      %426 = vmatprep.subr.mxu0 0.0
      %427 = vmatpush2.msra.mxu0 0.0
      %428 = vmatprep.subr.mxu0 0.0
      %429 = vmatpush2.msra.mxu0 0.0
      %430 = vmatprep.subr.mxu0 0.0
      %431 = vmatpush2.msra.mxu0 0.0
      %432 = vmatprep.subr.mxu0 0.0
      %433 = vmatpush2.msra.mxu0 0.0
      %434 = vmatprep.subr.mxu0 0.0
      %435 = vmatpush2.msra.mxu0 0.0
      %436 = vmatprep.subr.mxu0 0.0
      %437 = vmatpush2.msra.mxu0 0.0
      %438 = vmatprep.subr.mxu0 0.0
      %439 = vmatpush2.msra.mxu0 0.0
      %440 = vmatprep.subr.mxu0 0.0
      %441 = vmatpush2.msra.mxu0 0.0
      %442 = vmatprep.subr.mxu0 0.0
      %443 = vmatpush2.msra.mxu0 0.0
      %444 = vmatprep.subr.mxu0 0.0
      %445 = vmatpush2.msra.mxu0 0.0
      %446 = vmatprep.subr.mxu0 0.0
      %447 = vmatpush2.msra.mxu0 0.0
      %448 = vmatprep.subr.mxu0 0.0
      %449 = vmatpush2.msra.mxu0 0.0
      %450 = vmatprep.subr.mxu0 0.0
      %451 = vmatpush2.msra.mxu0 0.0
      %452 = vmatprep.subr.mxu0 0.0
      %453 = vmatpush2.msra.mxu0 0.0
      %454 = vmatprep.mubr.f32.mxu0 0.0
      %455 = vmatmul.mubr.f32.gmra.mxu0 %v379
      %v456 = vpop.f32.mrf.mxu0
      %v457 = vadd.f32 0.0, %v456
      %v458 = vpop.f32.mrf.mxu0
      %459 = vmatprep.mubr.f32.mxu0 0.0
      %460 = vmatmul.mubr.f32.gmra.mxu0 %v382
      %v461 = vpop.f32.mrf.mxu0
      %v462 = vadd.f32 0.0, %v461
      %v463 = vpop.f32.mrf.mxu0
      %464 = vmatprep.mubr.f32.mxu0 0.0
      %465 = vmatmul.mubr.f32.gmra.mxu0 %v385
      %v466 = vpop.f32.mrf.mxu0
      %v467 = vadd.f32 0.0, %v466
      %v468 = vpop.f32.mrf.mxu0
      %469 = vmatprep.mubr.f32.mxu0 0.0
      %470 = vmatmul.mubr.f32.gmra.mxu0 %v388
      %v471 = vpop.f32.mrf.mxu0
      %v472 = vadd.f32 0.0, %v471
      %v473 = vpop.f32.mrf.mxu0
      %474 = vdwg.mxu0
      %v476 = vsel %vm377, %v368, 0
      %v479 = vsel %vm377, %v369, 0
      %v482 = vsel %vm377, %v370, 0
      %v485 = vsel %vm377, %v371, 0
      %487 = vmatprep.subr.mxu0 0.0
      %488 = vmatpush1.msra.mxu0 0.0
      %489 = vmatprep.subr.mxu0 0.0
      %490 = vmatpush1.msra.mxu0 0.0
      %491 = vmatprep.subr.mxu0 0.0
      %492 = vmatpush1.msra.mxu0 0.0
      %493 = vmatprep.subr.mxu0 0.0
      %494 = vmatpush1.msra.mxu0 0.0
      %495 = vmatprep.subr.mxu0 0.0
      %496 = vmatpush1.msra.mxu0 0.0
      %497 = vmatprep.subr.mxu0 0.0
      %498 = vmatpush1.msra.mxu0 0.0
      %499 = vmatprep.subr.mxu0 0.0
      %500 = vmatpush1.msra.mxu0 0.0
      %501 = vmatprep.subr.mxu0 0.0
      %502 = vmatpush1.msra.mxu0 0.0
      %503 = vmatprep.subr.mxu0 0.0
      %504 = vmatpush1.msra.mxu0 0.0
      %505 = vmatprep.subr.mxu0 0.0
      %506 = vmatpush1.msra.mxu0 0.0
      %507 = vmatprep.subr.mxu0 0.0
      %508 = vmatpush1.msra.mxu0 0.0
      %509 = vmatprep.subr.mxu0 0.0
      %510 = vmatpush1.msra.mxu0 0.0
      %511 = vmatprep.subr.mxu0 0.0
      %512 = vmatpush1.msra.mxu0 0.0
      %513 = vmatprep.subr.mxu0 0.0
      %514 = vmatpush1.msra.mxu0 0.0
      %515 = vmatprep.subr.mxu0 0.0
      %516 = vmatpush1.msra.mxu0 %v357
      %517 = vmatprep.subr.mxu0 0.0
      %518 = vmatpush1.msra.mxu0 %v356
      %519 = vmatprep.subr.mxu0 0.0
      %520 = vmatpush2.msra.mxu0 0.0
      %521 = vmatprep.subr.mxu0 0.0
      %522 = vmatpush2.msra.mxu0 0.0
      %523 = vmatprep.subr.mxu0 0.0
      %524 = vmatpush2.msra.mxu0 0.0
      %525 = vmatprep.subr.mxu0 0.0
      %526 = vmatpush2.msra.mxu0 0.0
      %527 = vmatprep.subr.mxu0 0.0
      %528 = vmatpush2.msra.mxu0 0.0
      %529 = vmatprep.subr.mxu0 0.0
      %530 = vmatpush2.msra.mxu0 0.0
      %531 = vmatprep.subr.mxu0 0.0
      %532 = vmatpush2.msra.mxu0 0.0
      %533 = vmatprep.subr.mxu0 0.0
      %534 = vmatpush2.msra.mxu0 0.0
      %535 = vmatprep.subr.mxu0 0.0
      %536 = vmatpush2.msra.mxu0 0.0
      %537 = vmatprep.subr.mxu0 0.0
      %538 = vmatpush2.msra.mxu0 0.0
      %539 = vmatprep.subr.mxu0 0.0
      %540 = vmatpush2.msra.mxu0 0.0
      %541 = vmatprep.subr.mxu0 0.0
      %542 = vmatpush2.msra.mxu0 0.0
      %543 = vmatprep.subr.mxu0 0.0
      %544 = vmatpush2.msra.mxu0 0.0
      %545 = vmatprep.subr.mxu0 0.0
      %546 = vmatpush2.msra.mxu0 0.0
      %547 = vmatprep.subr.mxu0 0.0
      %548 = vmatpush2.msra.mxu0 0.0
      %549 = vmatprep.subr.mxu0 0.0
      %550 = vmatpush2.msra.mxu0 0.0
      %551 = vmatprep.mubr.f32.mxu0 0.0
      %552 = vmatmul.mubr.f32.gmra.mxu0 %v476
      %v553 = vpop.f32.mrf.mxu0
      %v554 = vadd.f32 %v457, %v553
      %v555 = vpop.f32.mrf.mxu0
      %556 = vmatprep.mubr.f32.mxu0 0.0
      %557 = vmatmul.mubr.f32.gmra.mxu0 %v479
      %v558 = vpop.f32.mrf.mxu0
      %v559 = vadd.f32 %v462, %v558
      %v560 = vpop.f32.mrf.mxu0
      %561 = vmatprep.mubr.f32.mxu0 0.0
      %562 = vmatmul.mubr.f32.gmra.mxu0 %v482
      %v563 = vpop.f32.mrf.mxu0
      %v564 = vadd.f32 %v467, %v563
      %v565 = vpop.f32.mrf.mxu0
      %566 = vmatprep.mubr.f32.mxu0 0.0
      %567 = vmatmul.mubr.f32.gmra.mxu0 %v485
      %v568 = vpop.f32.mrf.mxu0
      %v569 = vadd.f32 %v472, %v568
      %v570 = vpop.f32.mrf.mxu0
      %571 = vdwg.mxu0
      %s572 = scalar_lea.vmem %s1, 64
      %v573 = vld [vmem:[%s572] sm:$0xff]
      %v574 = vld [vmem:[%s572 + $0x8] sm:$0xff]
      %v575 = vld [vmem:[%s572 + $0x10] sm:$0xff]
      %v576 = vld [vmem:[%s572 + $0x18] sm:$0xff]
      %v578 = vsel %vm377, %v573, 0
      %v581 = vsel %vm377, %v574, 0
      %v584 = vsel %vm377, %v575, 0
      %v587 = vsel %vm377, %v576, 0
      %589 = vmatprep.subr.mxu0 0.0
      %590 = vmatpush1.msra.mxu0 0.0
      %591 = vmatprep.subr.mxu0 0.0
      %592 = vmatpush1.msra.mxu0 0.0
      %593 = vmatprep.subr.mxu0 0.0
      %594 = vmatpush1.msra.mxu0 0.0
      %595 = vmatprep.subr.mxu0 0.0
      %596 = vmatpush1.msra.mxu0 0.0
      %597 = vmatprep.subr.mxu0 0.0
      %598 = vmatpush1.msra.mxu0 0.0
      %599 = vmatprep.subr.mxu0 0.0
      %600 = vmatpush1.msra.mxu0 0.0
      %601 = vmatprep.subr.mxu0 0.0
      %602 = vmatpush1.msra.mxu0 0.0
      %603 = vmatprep.subr.mxu0 0.0
      %604 = vmatpush1.msra.mxu0 0.0
      %605 = vmatprep.subr.mxu0 0.0
      %606 = vmatpush1.msra.mxu0 0.0
      %607 = vmatprep.subr.mxu0 0.0
      %608 = vmatpush1.msra.mxu0 0.0
      %609 = vmatprep.subr.mxu0 0.0
      %610 = vmatpush1.msra.mxu0 0.0
      %611 = vmatprep.subr.mxu0 0.0
      %612 = vmatpush1.msra.mxu0 0.0
      %613 = vmatprep.subr.mxu0 0.0
      %614 = vmatpush1.msra.mxu0 0.0
      %615 = vmatprep.subr.mxu0 0.0
      %616 = vmatpush1.msra.mxu0 0.0
      %617 = vmatprep.subr.mxu0 0.0
      %618 = vmatpush1.msra.mxu0 %v367
      %619 = vmatprep.subr.mxu0 0.0
      %620 = vmatpush1.msra.mxu0 %v366
      %621 = vmatprep.subr.mxu0 0.0
      %622 = vmatpush2.msra.mxu0 0.0
      %623 = vmatprep.subr.mxu0 0.0
      %624 = vmatpush2.msra.mxu0 0.0
      %625 = vmatprep.subr.mxu0 0.0
      %626 = vmatpush2.msra.mxu0 0.0
      %627 = vmatprep.subr.mxu0 0.0
      %628 = vmatpush2.msra.mxu0 0.0
      %629 = vmatprep.subr.mxu0 0.0
      %630 = vmatpush2.msra.mxu0 0.0
      %631 = vmatprep.subr.mxu0 0.0
      %632 = vmatpush2.msra.mxu0 0.0
      %633 = vmatprep.subr.mxu0 0.0
      %634 = vmatpush2.msra.mxu0 0.0
      %635 = vmatprep.subr.mxu0 0.0
      %636 = vmatpush2.msra.mxu0 0.0
      %637 = vmatprep.subr.mxu0 0.0
      %638 = vmatpush2.msra.mxu0 0.0
      %639 = vmatprep.subr.mxu0 0.0
      %640 = vmatpush2.msra.mxu0 0.0
      %641 = vmatprep.subr.mxu0 0.0
      %642 = vmatpush2.msra.mxu0 0.0
      %643 = vmatprep.subr.mxu0 0.0
      %644 = vmatpush2.msra.mxu0 0.0
      %645 = vmatprep.subr.mxu0 0.0
      %646 = vmatpush2.msra.mxu0 0.0
      %647 = vmatprep.subr.mxu0 0.0
      %648 = vmatpush2.msra.mxu0 0.0
      %649 = vmatprep.subr.mxu0 0.0
      %650 = vmatpush2.msra.mxu0 0.0
      %651 = vmatprep.subr.mxu0 0.0
      %652 = vmatpush2.msra.mxu0 0.0
      %653 = vmatprep.mubr.f32.mxu0 0.0
      %654 = vmatmul.mubr.f32.gmra.mxu0 %v578
      %v655 = vpop.f32.mrf.mxu0
      %v656 = vadd.f32 0.0, %v655
      %v657 = vpop.f32.mrf.mxu0
      %658 = vmatprep.mubr.f32.mxu0 0.0
      %659 = vmatmul.mubr.f32.gmra.mxu0 %v581
      %v660 = vpop.f32.mrf.mxu0
      %v661 = vadd.f32 0.0, %v660
      %v662 = vpop.f32.mrf.mxu0
      %663 = vmatprep.mubr.f32.mxu0 0.0
      %664 = vmatmul.mubr.f32.gmra.mxu0 %v584
      %v665 = vpop.f32.mrf.mxu0
      %v666 = vadd.f32 0.0, %v665
      %v667 = vpop.f32.mrf.mxu0
      %668 = vmatprep.mubr.f32.mxu0 0.0
      %669 = vmatmul.mubr.f32.gmra.mxu0 %v587
      %v670 = vpop.f32.mrf.mxu0
      %v671 = vadd.f32 0.0, %v670
      %v672 = vpop.f32.mrf.mxu0
      %673 = vdwg.mxu0
      %v674 = vadd.f32 %v554, %v656
      %v675 = vadd.f32 %v559, %v661
      %v676 = vadd.f32 %v564, %v666
      %v677 = vadd.f32 %v569, %v671
      // Predicated region
      $region45: #{tpu_custom_call.1} parent=39 // pred_check
        %p678 = pneg %p292
      $region46: #{tpu_custom_call.1} parent=39 // pred_check_branch
        %680 = sbr.rel (%p678) target = $region48
      $region47: #{tpu_custom_call.1} parent=39 // pred_region
        %v681 = vsel %vm330, 1, 0
        %vm682 = vcmp.eq.s32.totalorder %v681, 1
        %v683 = vsel %vm682, %v674, 0.0
        %v684 = vsel %vm682, %v675, 0.0
        %v685 = vsel %vm682, %v676, 0.0
        %v686 = vsel %vm682, %v677, 0.0
        %vm687 = vcmask 261120
        %v688 = vsel %vm687, %v683, 0.0
        %689 = vadd.xlane.f32.xlu0 %v688
        %v690 = vpop.xlane.xlu0 %689
        %v691 = vsel %vm687, %v684, 0.0
        %692 = vadd.xlane.f32.xlu0 %v691
        %v693 = vpop.xlane.xlu0 %692
        %v694 = vsel %vm687, %v685, 0.0
        %695 = vadd.xlane.f32.xlu0 %v694
        %v696 = vpop.xlane.xlu0 %695
        %v697 = vsel %vm687, %v686, 0.0
        %698 = vadd.xlane.f32.xlu0 %v697
        %v699 = vpop.xlane.xlu0 %698
        %v700 = vmul.f32 %v674, %v674
        %v701 = vmul.f32 %v675, %v675
        %v702 = vmul.f32 %v676, %v676
        %v703 = vmul.f32 %v677, %v677
        %v704 = vsel %vm682, %v700, 0.0
        %v705 = vsel %vm682, %v701, 0.0
        %v706 = vsel %vm682, %v702, 0.0
        %v707 = vsel %vm682, %v703, 0.0
        %v708 = vsel %vm687, %v704, 0.0
        %709 = vadd.xlane.f32.xlu0 %v708
        %v710 = vpop.xlane.xlu0 %709
        %v711 = vsel %vm687, %v705, 0.0
        %712 = vadd.xlane.f32.xlu0 %v711
        %v713 = vpop.xlane.xlu0 %712
        %v714 = vsel %vm687, %v706, 0.0
        %715 = vadd.xlane.f32.xlu0 %v714
        %v716 = vpop.xlane.xlu0 %715
        %v717 = vsel %vm687, %v707, 0.0
        %718 = vadd.xlane.f32.xlu0 %v717
        %v719 = vpop.xlane.xlu0 %718
        %v720 = vld [vmem:[%s5] sm:$0xff]
        %v721 = vld [vmem:[%s5 + $0x8] sm:$0xff]
        %v722 = vld [vmem:[%s5 + $0x10] sm:$0xff]
        %v723 = vld [vmem:[%s5 + $0x18] sm:$0xff]
        %v724 = vadd.f32 %v720, %v690
        %v725 = vadd.f32 %v721, %v693
        %v726 = vadd.f32 %v722, %v696
        %v727 = vadd.f32 %v723, %v699
        %vm728 = vcmask 7168
        %729 = vst.msk [vmem:[%s5] sm:$0xff] %vm728, %v724
        %730 = vst.msk [vmem:[%s5 + $0x8] sm:$0xff] %vm728, %v725
        %731 = vst.msk [vmem:[%s5 + $0x10] sm:$0xff] %vm728, %v726
        %732 = vst.msk [vmem:[%s5 + $0x18] sm:$0xff] %vm728, %v727
        %v733 = vld [vmem:[%s6] sm:$0xff]
        %v734 = vld [vmem:[%s6 + $0x8] sm:$0xff]
        %v735 = vld [vmem:[%s6 + $0x10] sm:$0xff]
        %v736 = vld [vmem:[%s6 + $0x18] sm:$0xff]
        %v737 = vadd.f32 %v733, %v710
        %v738 = vadd.f32 %v734, %v713
        %v739 = vadd.f32 %v735, %v716
        %v740 = vadd.f32 %v736, %v719
        %741 = vst.msk [vmem:[%s6] sm:$0xff] %vm728, %v737
        %742 = vst.msk [vmem:[%s6 + $0x8] sm:$0xff] %vm728, %v738
        %743 = vst.msk [vmem:[%s6 + $0x10] sm:$0xff] %vm728, %v739
        %744 = vst.msk [vmem:[%s6 + $0x18] sm:$0xff] %vm728, %v740
      $region48: #{tpu_custom_call.1} parent=39 // pred_fallthru
        _
      %p745 = scmp.eq.s32.totalorder %s24, 1
      // Predicated region
      $region49: #{tpu_custom_call.1} parent=39 // pred_check
        %p746 = pneg %p745
      $region50: #{tpu_custom_call.1} parent=39 // pred_check_branch
        %748 = sbr.rel (%p746) target = $region52
      $region51: #{tpu_custom_call.1} parent=39 // pred_region
        %v749 = vld [vmem:[%s5] sm:$0xff]
        %v750 = vld [vmem:[%s5 + $0x8] sm:$0xff]
        %v751 = vld [vmem:[%s6] sm:$0xff]
        %v752 = vld [vmem:[%s6 + $0x8] sm:$0xff]
        %v753 = vld [vmem:[%s3] sm:$0xff]
        %v754 = vld [vmem:[%s3 + $0x8] sm:$0xff]
        %v755 = vld [vmem:[%s4] sm:$0xff]
        %v756 = vld [vmem:[%s4 + $0x8] sm:$0xff]
        %v757 = vmul.f32 %v749, 0.03125
        %v758 = vmul.f32 %v750, 0.03125
        %v759 = vmul.f32 %v751, 0.03125
        %v760 = vmul.f32 %v752, 0.03125
        %v761 = vmul.f32 %v757, %v757
        %v762 = vmul.f32 %v758, %v758
        %v763 = vsub.f32 %v759, %v761
        %v764 = vsub.f32 %v760, %v762
        %v765 = vmax.f32 %v763, 0.0
        %v766 = vmax.f32 %v764, 0.0
        %v767 = vadd.f32 %v765, 1e-05
        %v768 = vadd.f32 %v766, 1e-05
        %v769 = vrsqrt.pop %v767
        %v770 = vrsqrt.pop %v768
        %v771 = vmul.f32 %v753, %v769
        %v772 = vmul.f32 %v754, %v770
        %v773 = vmul.f32 %v757, %v771
        %v774 = vmul.f32 %v758, %v772
        %v775 = vsub.f32 %v755, %v773
        %v776 = vsub.f32 %v756, %v774
        %778 = vset.pattern.permute.xlu0 0
        %779 = vperm.xlu0 %778, %v771
        %v780 = vpop.permute.xlu0 %779
        %783 = vset.pattern.permute.xlu0 0
        %784 = vperm.xlu0 %783, %v772
        %v785 = vpop.permute.xlu0 %784
        %v787 = vmul.f32 %v674, %v780
        %v788 = vmul.f32 %v675, %v785
        %790 = vset.pattern.permute.xlu0 0
        %791 = vperm.xlu0 %790, %v775
        %v792 = vpop.permute.xlu0 %791
        %795 = vset.pattern.permute.xlu0 0
        %796 = vperm.xlu0 %795, %v776
        %v797 = vpop.permute.xlu0 %796
        %v799 = vadd.f32 %v787, %v792
        %v800 = vadd.f32 %v788, %v797
        %v801 = vmul.f32 %v799, 0.2
        %v802 = vmul.f32 %v800, 0.2
        %v803 = vmax.f32 %v799, %v801
        %v804 = vmax.f32 %v800, %v802
        %805 = vrot.lane.b32.xlu0 %v803, 32
        %v806 = vpop.permute.xlu0 %805
        %v807 = vsel %vm333, %v806, %v803
        %808 = vrot.lane.b32.xlu0 %v804, 32
        %v809 = vpop.permute.xlu0 %808
        %v810 = vsel %vm333, %v809, %v804
        %811 = vrot.lane.b32.xlu0 %v807, 32
        %v812 = vpop.permute.xlu0 %811
        %813 = vrot.lane.b32.xlu0 %v810, 32
        %v814 = vpop.permute.xlu0 %813
        %v815 = vsel %vm333, %v812, %v803
        %v816 = vsel %vm333, %v814, %v804
        %819 = vrot.lane.b32.xlu0 %v815, 97
        %v820 = vpop.permute.xlu0 %819
        %821 = vrot.lane.b32.xlu0 %v816, 97
        %v822 = vpop.permute.xlu0 %821
        %v825 = vsel %vm347, %v820, 0.0
        %v826 = vsel %vm347, %v822, 0.0
        %827 = vrot.lane.b32.xlu0 %v815, 127
        %v828 = vpop.permute.xlu0 %827
        %829 = vrot.lane.b32.xlu0 %v816, 127
        %v830 = vpop.permute.xlu0 %829
        %v833 = vsel %vm359, %v828, 0.0
        %v834 = vsel %vm359, %v830, 0.0
        %v835 = vld [vmem:[%s2] sm:$0xff]
        %v836 = vld [vmem:[%s2 + $0x8] sm:$0xff]
        %s837 = scalar_lea.vmem %s2, 16
        %v838 = vld [vmem:[%s837] sm:$0xff]
        %v839 = vld [vmem:[%s837 + $0x8] sm:$0xff]
        %v841 = vsel %vm377, %v838, 0
        %v844 = vsel %vm377, %v839, 0
        %846 = vmatprep.subr.mxu0 0.0
        %847 = vmatpush1.msra.mxu0 0.0
        %848 = vmatprep.subr.mxu0 0.0
        %849 = vmatpush1.msra.mxu0 0.0
        %850 = vmatprep.subr.mxu0 0.0
        %851 = vmatpush1.msra.mxu0 0.0
        %852 = vmatprep.subr.mxu0 0.0
        %853 = vmatpush1.msra.mxu0 0.0
        %854 = vmatprep.subr.mxu0 0.0
        %855 = vmatpush1.msra.mxu0 0.0
        %856 = vmatprep.subr.mxu0 0.0
        %857 = vmatpush1.msra.mxu0 0.0
        %858 = vmatprep.subr.mxu0 0.0
        %859 = vmatpush1.msra.mxu0 0.0
        %860 = vmatprep.subr.mxu0 0.0
        %861 = vmatpush1.msra.mxu0 0.0
        %862 = vmatprep.subr.mxu0 0.0
        %863 = vmatpush1.msra.mxu0 0.0
        %864 = vmatprep.subr.mxu0 0.0
        %865 = vmatpush1.msra.mxu0 0.0
        %866 = vmatprep.subr.mxu0 0.0
        %867 = vmatpush1.msra.mxu0 0.0
        %868 = vmatprep.subr.mxu0 0.0
        %869 = vmatpush1.msra.mxu0 0.0
        %870 = vmatprep.subr.mxu0 0.0
        %871 = vmatpush1.msra.mxu0 0.0
        %872 = vmatprep.subr.mxu0 0.0
        %873 = vmatpush1.msra.mxu0 0.0
        %874 = vmatprep.subr.mxu0 0.0
        %875 = vmatpush1.msra.mxu0 %v804
        %876 = vmatprep.subr.mxu0 0.0
        %877 = vmatpush1.msra.mxu0 %v803
        %878 = vmatprep.subr.mxu0 0.0
        %879 = vmatpush2.msra.mxu0 0.0
        %880 = vmatprep.subr.mxu0 0.0
        %881 = vmatpush2.msra.mxu0 0.0
        %882 = vmatprep.subr.mxu0 0.0
        %883 = vmatpush2.msra.mxu0 0.0
        %884 = vmatprep.subr.mxu0 0.0
        %885 = vmatpush2.msra.mxu0 0.0
        %886 = vmatprep.subr.mxu0 0.0
        %887 = vmatpush2.msra.mxu0 0.0
        %888 = vmatprep.subr.mxu0 0.0
        %889 = vmatpush2.msra.mxu0 0.0
        %890 = vmatprep.subr.mxu0 0.0
        %891 = vmatpush2.msra.mxu0 0.0
        %892 = vmatprep.subr.mxu0 0.0
        %893 = vmatpush2.msra.mxu0 0.0
        %894 = vmatprep.subr.mxu0 0.0
        %895 = vmatpush2.msra.mxu0 0.0
        %896 = vmatprep.subr.mxu0 0.0
        %897 = vmatpush2.msra.mxu0 0.0
        %898 = vmatprep.subr.mxu0 0.0
        %899 = vmatpush2.msra.mxu0 0.0
        %900 = vmatprep.subr.mxu0 0.0
        %901 = vmatpush2.msra.mxu0 0.0
        %902 = vmatprep.subr.mxu0 0.0
        %903 = vmatpush2.msra.mxu0 0.0
        %904 = vmatprep.subr.mxu0 0.0
        %905 = vmatpush2.msra.mxu0 0.0
        %906 = vmatprep.subr.mxu0 0.0
        %907 = vmatpush2.msra.mxu0 0.0
        %908 = vmatprep.subr.mxu0 0.0
        %909 = vmatpush2.msra.mxu0 0.0
        %910 = vmatprep.mubr.f32.mxu0 0.0
        %911 = vmatmul.mubr.f32.gmra.mxu0 %v841
        %v912 = vpop.f32.mrf.mxu0
        %v913 = vadd.f32 0.0, %v912
        %v914 = vpop.f32.mrf.mxu0
        %915 = vmatprep.mubr.f32.mxu0 0.0
        %916 = vmatmul.mubr.f32.gmra.mxu0 %v844
        %v917 = vpop.f32.mrf.mxu0
        %v918 = vadd.f32 0.0, %v917
        %v919 = vpop.f32.mrf.mxu0
        %920 = vdwg.mxu0
        %v922 = vsel %vm377, %v835, 0
        %v925 = vsel %vm377, %v836, 0
        %927 = vmatprep.subr.mxu0 0.0
        %928 = vmatpush1.msra.mxu0 0.0
        %929 = vmatprep.subr.mxu0 0.0
        %930 = vmatpush1.msra.mxu0 0.0
        %931 = vmatprep.subr.mxu0 0.0
        %932 = vmatpush1.msra.mxu0 0.0
        %933 = vmatprep.subr.mxu0 0.0
        %934 = vmatpush1.msra.mxu0 0.0
        %935 = vmatprep.subr.mxu0 0.0
        %936 = vmatpush1.msra.mxu0 0.0
        %937 = vmatprep.subr.mxu0 0.0
        %938 = vmatpush1.msra.mxu0 0.0
        %939 = vmatprep.subr.mxu0 0.0
        %940 = vmatpush1.msra.mxu0 0.0
        %941 = vmatprep.subr.mxu0 0.0
        %942 = vmatpush1.msra.mxu0 0.0
        %943 = vmatprep.subr.mxu0 0.0
        %944 = vmatpush1.msra.mxu0 0.0
        %945 = vmatprep.subr.mxu0 0.0
        %946 = vmatpush1.msra.mxu0 0.0
        %947 = vmatprep.subr.mxu0 0.0
        %948 = vmatpush1.msra.mxu0 0.0
        %949 = vmatprep.subr.mxu0 0.0
        %950 = vmatpush1.msra.mxu0 0.0
        %951 = vmatprep.subr.mxu0 0.0
        %952 = vmatpush1.msra.mxu0 0.0
        %953 = vmatprep.subr.mxu0 0.0
        %954 = vmatpush1.msra.mxu0 0.0
        %955 = vmatprep.subr.mxu0 0.0
        %956 = vmatpush1.msra.mxu0 %v826
        %957 = vmatprep.subr.mxu0 0.0
        %958 = vmatpush1.msra.mxu0 %v825
        %959 = vmatprep.subr.mxu0 0.0
        %960 = vmatpush2.msra.mxu0 0.0
        %961 = vmatprep.subr.mxu0 0.0
        %962 = vmatpush2.msra.mxu0 0.0
        %963 = vmatprep.subr.mxu0 0.0
        %964 = vmatpush2.msra.mxu0 0.0
        %965 = vmatprep.subr.mxu0 0.0
        %966 = vmatpush2.msra.mxu0 0.0
        %967 = vmatprep.subr.mxu0 0.0
        %968 = vmatpush2.msra.mxu0 0.0
        %969 = vmatprep.subr.mxu0 0.0
        %970 = vmatpush2.msra.mxu0 0.0
        %971 = vmatprep.subr.mxu0 0.0
        %972 = vmatpush2.msra.mxu0 0.0
        %973 = vmatprep.subr.mxu0 0.0
        %974 = vmatpush2.msra.mxu0 0.0
        %975 = vmatprep.subr.mxu0 0.0
        %976 = vmatpush2.msra.mxu0 0.0
        %977 = vmatprep.subr.mxu0 0.0
        %978 = vmatpush2.msra.mxu0 0.0
        %979 = vmatprep.subr.mxu0 0.0
        %980 = vmatpush2.msra.mxu0 0.0
        %981 = vmatprep.subr.mxu0 0.0
        %982 = vmatpush2.msra.mxu0 0.0
        %983 = vmatprep.subr.mxu0 0.0
        %984 = vmatpush2.msra.mxu0 0.0
        %985 = vmatprep.subr.mxu0 0.0
        %986 = vmatpush2.msra.mxu0 0.0
        %987 = vmatprep.subr.mxu0 0.0
        %988 = vmatpush2.msra.mxu0 0.0
        %989 = vmatprep.subr.mxu0 0.0
        %990 = vmatpush2.msra.mxu0 0.0
        %991 = vmatprep.mubr.f32.mxu0 0.0
        %992 = vmatmul.mubr.f32.gmra.mxu0 %v922
        %v993 = vpop.f32.mrf.mxu0
        %v994 = vadd.f32 %v913, %v993
        %v995 = vpop.f32.mrf.mxu0
        %996 = vmatprep.mubr.f32.mxu0 0.0
        %997 = vmatmul.mubr.f32.gmra.mxu0 %v925
        %v998 = vpop.f32.mrf.mxu0
        %v999 = vadd.f32 %v918, %v998
        %v1000 = vpop.f32.mrf.mxu0
        %1001 = vdwg.mxu0
        %s1002 = scalar_lea.vmem %s2, 32
        %v1003 = vld [vmem:[%s1002] sm:$0xff]
        %v1004 = vld [vmem:[%s1002 + $0x8] sm:$0xff]
        %v1006 = vsel %vm377, %v1003, 0
        %v1009 = vsel %vm377, %v1004, 0
        %1011 = vmatprep.subr.mxu0 0.0
        %1012 = vmatpush1.msra.mxu0 0.0
        %1013 = vmatprep.subr.mxu0 0.0
        %1014 = vmatpush1.msra.mxu0 0.0
        %1015 = vmatprep.subr.mxu0 0.0
        %1016 = vmatpush1.msra.mxu0 0.0
        %1017 = vmatprep.subr.mxu0 0.0
        %1018 = vmatpush1.msra.mxu0 0.0
        %1019 = vmatprep.subr.mxu0 0.0
        %1020 = vmatpush1.msra.mxu0 0.0
        %1021 = vmatprep.subr.mxu0 0.0
        %1022 = vmatpush1.msra.mxu0 0.0
        %1023 = vmatprep.subr.mxu0 0.0
        %1024 = vmatpush1.msra.mxu0 0.0
        %1025 = vmatprep.subr.mxu0 0.0
        %1026 = vmatpush1.msra.mxu0 0.0
        %1027 = vmatprep.subr.mxu0 0.0
        %1028 = vmatpush1.msra.mxu0 0.0
        %1029 = vmatprep.subr.mxu0 0.0
        %1030 = vmatpush1.msra.mxu0 0.0
        %1031 = vmatprep.subr.mxu0 0.0
        %1032 = vmatpush1.msra.mxu0 0.0
        %1033 = vmatprep.subr.mxu0 0.0
        %1034 = vmatpush1.msra.mxu0 0.0
        %1035 = vmatprep.subr.mxu0 0.0
        %1036 = vmatpush1.msra.mxu0 0.0
        %1037 = vmatprep.subr.mxu0 0.0
        %1038 = vmatpush1.msra.mxu0 0.0
        %1039 = vmatprep.subr.mxu0 0.0
        %1040 = vmatpush1.msra.mxu0 %v834
        %1041 = vmatprep.subr.mxu0 0.0
        %1042 = vmatpush1.msra.mxu0 %v833
        %1043 = vmatprep.subr.mxu0 0.0
        %1044 = vmatpush2.msra.mxu0 0.0
        %1045 = vmatprep.subr.mxu0 0.0
        %1046 = vmatpush2.msra.mxu0 0.0
        %1047 = vmatprep.subr.mxu0 0.0
        %1048 = vmatpush2.msra.mxu0 0.0
        %1049 = vmatprep.subr.mxu0 0.0
        %1050 = vmatpush2.msra.mxu0 0.0
        %1051 = vmatprep.subr.mxu0 0.0
        %1052 = vmatpush2.msra.mxu0 0.0
        %1053 = vmatprep.subr.mxu0 0.0
        %1054 = vmatpush2.msra.mxu0 0.0
        %1055 = vmatprep.subr.mxu0 0.0
        %1056 = vmatpush2.msra.mxu0 0.0
        %1057 = vmatprep.subr.mxu0 0.0
        %1058 = vmatpush2.msra.mxu0 0.0
        %1059 = vmatprep.subr.mxu0 0.0
        %1060 = vmatpush2.msra.mxu0 0.0
        %1061 = vmatprep.subr.mxu0 0.0
        %1062 = vmatpush2.msra.mxu0 0.0
        %1063 = vmatprep.subr.mxu0 0.0
        %1064 = vmatpush2.msra.mxu0 0.0
        %1065 = vmatprep.subr.mxu0 0.0
        %1066 = vmatpush2.msra.mxu0 0.0
        %1067 = vmatprep.subr.mxu0 0.0
        %1068 = vmatpush2.msra.mxu0 0.0
        %1069 = vmatprep.subr.mxu0 0.0
        %1070 = vmatpush2.msra.mxu0 0.0
        %1071 = vmatprep.subr.mxu0 0.0
        %1072 = vmatpush2.msra.mxu0 0.0
        %1073 = vmatprep.subr.mxu0 0.0
        %1074 = vmatpush2.msra.mxu0 0.0
        %1075 = vmatprep.mubr.f32.mxu0 0.0
        %1076 = vmatmul.mubr.f32.gmra.mxu0 %v1006
        %v1077 = vpop.f32.mrf.mxu0
        %v1078 = vadd.f32 0.0, %v1077
        %v1079 = vpop.f32.mrf.mxu0
        %1080 = vmatprep.mubr.f32.mxu0 0.0
        %1081 = vmatmul.mubr.f32.gmra.mxu0 %v1009
        %v1082 = vpop.f32.mrf.mxu0
        %v1083 = vadd.f32 0.0, %v1082
        %v1084 = vpop.f32.mrf.mxu0
        %1085 = vdwg.mxu0
        %v1086 = vadd.f32 %v994, %v1078
        %v1087 = vadd.f32 %v999, %v1083
        %v1088 = vsel %vm330, 1, 0
        %vm1089 = vcmp.eq.s32.totalorder %v1088, 1
        %v1090 = vsel %vm1089, %v1086, 0.0
        %v1091 = vsel %vm1089, %v1087, 0.0
        %vm1092 = vcmask 261120
        %v1093 = vsel %vm1092, %v1090, 0.0
        %1094 = vadd.xlane.f32.xlu0 %v1093
        %v1095 = vpop.xlane.xlu0 %1094
        %v1096 = vsel %vm1092, %v1091, 0.0
        %1097 = vadd.xlane.f32.xlu0 %v1096
        %v1098 = vpop.xlane.xlu0 %1097
        %v1099 = vmul.f32 %v1086, %v1086
        %v1100 = vmul.f32 %v1087, %v1087
        %v1101 = vsel %vm1089, %v1099, 0.0
        %v1102 = vsel %vm1089, %v1100, 0.0
        %v1103 = vsel %vm1092, %v1101, 0.0
        %1104 = vadd.xlane.f32.xlu0 %v1103
        %v1105 = vpop.xlane.xlu0 %1104
        %v1106 = vsel %vm1092, %v1102, 0.0
        %1107 = vadd.xlane.f32.xlu0 %v1106
        %v1108 = vpop.xlane.xlu0 %1107
        %v1109 = vld [vmem:[%s7] sm:$0xff]
        %v1110 = vld [vmem:[%s7 + $0x8] sm:$0xff]
        %v1111 = vadd.f32 %v1109, %v1095
        %v1112 = vadd.f32 %v1110, %v1098
        %vm1113 = vcmask 7168
        %1114 = vst.msk [vmem:[%s7] sm:$0xff] %vm1113, %v1111
        %1115 = vst.msk [vmem:[%s7 + $0x8] sm:$0xff] %vm1113, %v1112
        %v1116 = vld [vmem:[%s8] sm:$0xff]
        %v1117 = vld [vmem:[%s8 + $0x8] sm:$0xff]
        %v1118 = vadd.f32 %v1116, %v1105
        %v1119 = vadd.f32 %v1117, %v1108
        %1120 = vst.msk [vmem:[%s8] sm:$0xff] %vm1113, %v1118
        %1121 = vst.msk [vmem:[%s8 + $0x8] sm:$0xff] %vm1113, %v1119
      $region52: #{tpu_custom_call.1} parent=39 // pred_fallthru
        _
      // Predicated region
      $region53: #{tpu_custom_call.1} parent=39 // pred_check
        %p1122 = pneg %p155
      $region54: #{tpu_custom_call.1} parent=39 // pred_check_branch
        %1124 = sbr.rel (%p1122) target = $region56
      $region55: #{tpu_custom_call.1} parent=39 // pred_region
        _
      $region56: #{tpu_custom_call.1} parent=39 // pred_fallthru
        _
      // Predicated region
      $region57: #{tpu_custom_call.1} parent=39 // pred_check
        %p1125 = pneg %p176
      $region58: #{tpu_custom_call.1} parent=39 // pred_check_branch
        %1127 = sbr.rel (%p1125) target = $region60
      $region59: #{tpu_custom_call.1} parent=39 // pred_region
        _
      $region60: #{tpu_custom_call.1} parent=39 // pred_fallthru
        _
      // Predicated region
      $region61: #{tpu_custom_call.1} parent=39 // pred_check
        %p1128 = pneg %p197
      $region62: #{tpu_custom_call.1} parent=39 // pred_check_branch
        %1130 = sbr.rel (%p1128) target = $region64
      $region63: #{tpu_custom_call.1} parent=39 // pred_region
        _
      $region64: #{tpu_custom_call.1} parent=39 // pred_fallthru
        _
      // Predicated region
      $region65: #{tpu_custom_call.1} parent=39 // pred_check
        %p1131 = pneg %p218
      $region66: #{tpu_custom_call.1} parent=39 // pred_check_branch
        %1133 = sbr.rel (%p1131) target = $region68
      $region67: #{tpu_custom_call.1} parent=39 // pred_region
        _
      $region68: #{tpu_custom_call.1} parent=39 // pred_fallthru
        _
      // Predicated region
      $region69: #{tpu_custom_call.1} parent=39 // pred_check
        %p1134 = pneg %p155
      $region70: #{tpu_custom_call.1} parent=39 // pred_check_branch
        %1136 = sbr.rel (%p1134) target = $region72
      $region71: #{tpu_custom_call.1} parent=39 // pred_region
        _
      $region72: #{tpu_custom_call.1} parent=39 // pred_fallthru
        _
      // Predicated region
      $region73: #{tpu_custom_call.1} parent=39 // pred_check
        %p1137 = pneg %p176
      $region74: #{tpu_custom_call.1} parent=39 // pred_check_branch
        %1139 = sbr.rel (%p1137) target = $region76
      $region75: #{tpu_custom_call.1} parent=39 // pred_region
        _
      $region76: #{tpu_custom_call.1} parent=39 // pred_fallthru
        _
      // Predicated region
      $region77: #{tpu_custom_call.1} parent=39 // pred_check
        %p1140 = pneg %p197
      $region78: #{tpu_custom_call.1} parent=39 // pred_check_branch
        %1142 = sbr.rel (%p1140) target = $region80
      $region79: #{tpu_custom_call.1} parent=39 // pred_region
        _
      $region80: #{tpu_custom_call.1} parent=39 // pred_fallthru
        _
      // Predicated region
      $region81: #{tpu_custom_call.1} parent=39 // pred_check
        %p1143 = pneg %p218
      $region82: #{tpu_custom_call.1} parent=39 // pred_check_branch
        %1145 = sbr.rel (%p1143) target = $region84
      $region83: #{tpu_custom_call.1} parent=39 // pred_region
        _
      $region84: #{tpu_custom_call.1} parent=39 // pred_fallthru
        _
    $region40: #{tpu_custom_call.1} parent=5 // pred_fallthru
      _
    %p1146 = scmp.le.s32.totalorder 2, %s15
    // Predicated region
    $region85: #{tpu_custom_call.1} parent=5 // pred_check
      %p1147 = pneg %p1146
    $region86: #{tpu_custom_call.1} parent=5 // pred_check_branch
      %1149 = sbr.rel (%p1147) target = $region88
    $region87: #{tpu_custom_call.1} parent=5 // pred_region
      %s1150 = ssub.s32 %s15, 2
    $region88: #{tpu_custom_call.1} parent=5 // pred_fallthru
      _
  $region6: #{tpu_custom_call.1} parent=0 // loop_footer
    %s19 = sadd.s32 1, %s15
  $region7: #{tpu_custom_call.1} parent=0 // loop_footer_branch
    %14 = sbr.rel target = $region3
  $region8: #{tpu_custom_call.1} parent=0 // loop_exit
    _

</llo_original>
